<compile_context>
chip_gen: v7x
topology: tpu7x:2x2x1
jax: 0.10.0
libtpu: 0.0.40
codegen_flags: <defaults>
</compile_context>

<pallas_src>
import functools

import jax
import jax.numpy as jnp
import numpy as np
from jax import lax
from jax.experimental import pallas as pl
from jax.experimental.pallas import tpu as pltpu


def _nfe_kernel(x_ref, curr_ref,
                w_hc0_ref, b_hc0_ref,
                w_in_ref, b_in_ref,
                whh_f_ref, whh_r_ref,
                wout_ref, bout_ref,
                out_ref, *, T, H):
    dot = functools.partial(jnp.dot, preferred_element_type=jnp.float32)
    B = curr_ref.shape[0]            # padded batch (multiple of 8)
    cdt = whh_f_ref.dtype            # bf16 compute dtype for MXU operands

    # Fused initial state: [h0 | c0] in a single matmul.  f32 result.
    hc0 = dot(curr_ref[...], w_hc0_ref[...]) + b_hc0_ref[...]       # [B, 2H]
    h0 = hc0[:, 0 * H:1 * H]
    c0 = hc0[:, 1 * H:2 * H]

    # Hoisted input projection for both directions, biases folded in.
    # One [T*B, D] x [D, 8H] matmul instead of T+1 tiny matmuls in the chain.
    xproj = dot(x_ref[...], w_in_ref[...]) + b_in_ref[...]          # [T*B, 8H]

    def gates_to_hc(gates, c):
        # gates: [B, 4H] f32, PyTorch gate order (i, f, g, o).
        i = jax.nn.sigmoid(gates[:, 0 * H:1 * H])
        f = jax.nn.sigmoid(gates[:, 1 * H:2 * H])
        g = jnp.tanh(gates[:, 2 * H:3 * H])
        o = jax.nn.sigmoid(gates[:, 3 * H:4 * H])
        c_new = f * c + i * g
        return o * jnp.tanh(c_new), c_new

    whh_f = whh_f_ref[...]
    whh_r = whh_r_ref[...]

    # Reverse-direction cell (one step on x[T-1] from (h0, c0)).  Depends only
    # on h0/c0, so it is issued before the serial forward chain.
    g_r = xproj[(T - 1) * B:T * B, 4 * H:8 * H] + dot(h0.astype(cdt), whh_r)
    h_bwd, _ = gates_to_hc(g_r, c0)

    # Forward direction: fully unrolled, only dot(h, whh_f) sits in the chain.
    h, c = h0, c0
    for t in range(T):
        g = xproj[t * B:(t + 1) * B, 0:4 * H] + dot(h.astype(cdt), whh_f)
        h, c = gates_to_hc(g, c)

    # Fused output Linear on concat([h_fwd, h_bwd]) with K = 2H.
    h_cat = jnp.concatenate([h, h_bwd], axis=-1).astype(cdt)        # [B, 2H]
    out = dot(h_cat, wout_ref[...]) + bout_ref[...]
    out_ref[...] = out.astype(out_ref.dtype)


def node_future_encoder(input_seqs, pred_seqs, params, mode=None):
    """input_seqs: [B, T_in, A, A, D], pred_seqs: [B, T_pred, A, A, D]."""
    del mode  # unused, matches reference

    x = pred_seqs[:, :, 1, 1]                       # [B, T, D]
    x = jnp.transpose(x, (1, 0, 2))                 # [T, B, D] (seq-major)
    curr = input_seqs[:, -1, 1, 1]                  # [B, D]

    T, B, D = x.shape
    H = params["wh0"].shape[1]
    out_dim = params["bout"].shape[-1]

    # Pad batch to a multiple of 8 sublanes so in-kernel slices are tile-aligned.
    B_pad = max(8, ((B + 7) // 8) * 8)
    if B_pad != B:
        x = jnp.pad(x, ((0, 0), (0, B_pad - B), (0, 0)))
        curr = jnp.pad(curr, ((0, B_pad - B), (0, 0)))

    cdt = jnp.bfloat16
    x_flat = x.reshape(T * B_pad, D).astype(cdt)    # flatten in the wrapper
    curr = curr.astype(cdt)

    # Pack / cast parameters (bf16 MXU operands, f32 biases).
    w_hc0 = jnp.concatenate([params["wh0"], params["wc0"]], axis=1).astype(cdt)   # [D, 2H]
    b_hc0 = jnp.concatenate([params["bh0"], params["bc0"]], axis=1)               # [1, 2H]
    w_in = jnp.concatenate([params["wi_f"], params["wi_r"]], axis=1).astype(cdt)  # [D, 8H]
    b_in = jnp.concatenate([params["b_f"], params["b_r"]], axis=1)                # [1, 8H]
    whh_f = params["whh_f"].astype(cdt)                                           # [H, 4H]
    whh_r = params["whh_r"].astype(cdt)                                           # [H, 4H]
    wout = jnp.concatenate([params["wout_f"], params["wout_b"]], axis=0).astype(cdt)  # [2H, out]
    bout = params["bout"]                                                         # [1, out]

    args = (x_flat, curr, w_hc0, b_hc0, w_in, b_in, whh_f, whh_r, wout, bout)
    vmem = pl.BlockSpec(memory_space=pltpu.MemorySpace.VMEM)

    out = pl.pallas_call(
        functools.partial(_nfe_kernel, T=T, H=H),
        out_shape=jax.ShapeDtypeStruct((B_pad, out_dim), jnp.float32),
        in_specs=[vmem] * len(args),
        out_specs=vmem,
    )(*args)
    return out[:B]


def init_params(key, state_dim=6, hidden=128, out_dim=64):
    """Deterministic synthetic parameters (PyTorch-style uniform init)."""
    keys = jax.random.split(key, 13)
    D, H = state_dim, hidden

    def u(k, shape, fan_in):
        bound = 1.0 / float(np.sqrt(fan_in))
        return jax.random.uniform(k, shape, jnp.float32, -bound, bound)

    p = {}
    p["wh0"] = u(keys[0], (D, H), D)
    p["bh0"] = u(keys[1], (1, H), D)
    p["wc0"] = u(keys[2], (D, H), D)
    p["bc0"] = u(keys[3], (1, H), D)
    # forward-direction LSTM weights (gate order i, f, g, o)
    p["wi_f"] = u(keys[4], (D, 4 * H), H)
    p["whh_f"] = u(keys[5], (H, 4 * H), H)
    p["b_f"] = u(keys[6], (1, 4 * H), H)      # b_ih + b_hh pre-summed
    # reverse-direction LSTM weights
    p["wi_r"] = u(keys[7], (D, 4 * H), H)
    p["whh_r"] = u(keys[8], (H, 4 * H), H)
    p["b_r"] = u(keys[9], (1, 4 * H), H)
    # output Linear split into forward / backward halves of the 2H concat
    p["wout_f"] = u(keys[10], (H, out_dim), 2 * H)
    p["wout_b"] = u(keys[11], (H, out_dim), 2 * H)
    p["bout"] = u(keys[12], (1, out_dim), 2 * H)
    return p


def reference(input_seqs, pred_seqs, p):
    """Pure-JAX f32 reference mirroring the PyTorch forward pass."""
    x = jnp.transpose(pred_seqs[:, :, 1, 1], (1, 0, 2))   # [T, B, D]
    curr = input_seqs[:, -1, 1, 1]                        # [B, D]
    H = p["wh0"].shape[1]
    h0 = curr @ p["wh0"] + p["bh0"]
    c0 = curr @ p["wc0"] + p["bc0"]

    def cell(x_t, h, c, wi, whh, b):
        g = x_t @ wi + h @ whh + b
        i = jax.nn.sigmoid(g[:, :H])
        f = jax.nn.sigmoid(g[:, H:2 * H])
        gg = jnp.tanh(g[:, 2 * H:3 * H])
        o = jax.nn.sigmoid(g[:, 3 * H:])
        c = f * c + i * gg
        h = o * jnp.tanh(c)
        return h, c

    def fwd(carry, x_t):
        h, c = carry
        h, c = cell(x_t, h, c, p["wi_f"], p["whh_f"], p["b_f"])
        return (h, c), None

    (h_fwd, _), _ = lax.scan(fwd, (h0, c0), x)
    h_bwd, _ = cell(x[-1], h0, c0, p["wi_r"], p["whh_r"], p["b_r"])
    return h_fwd @ p["wout_f"] + h_bwd @ p["wout_b"] + p["bout"]


if __name__ == "__main__":
    key = jax.random.PRNGKey(0)
    k1, k2, k3 = jax.random.split(key, 3)

    B, T_in, T_pred, A, D, H, OUT = 4, 5, 8, 3, 6, 128, 64
    input_seqs = jax.random.normal(k1, (B, T_in, A, A, D), jnp.float32)
    pred_seqs = jax.random.normal(k2, (B, T_pred, A, A, D), jnp.float32)
    params = init_params(k3, state_dim=D, hidden=H, out_dim=OUT)

    out = node_future_encoder(input_seqs, pred_seqs, params, mode="train")
    out = jax.block_until_ready(out)

    ref = reference(input_seqs, pred_seqs, params)
    assert out.shape == (B, OUT), out.shape
    np.testing.assert_allclose(np.asarray(out), np.asarray(ref), atol=2e-2, rtol=2e-2)
    print("KERNEL_OK")
</pallas_src>

<mosaic_0001>
module attributes {stable_mosaic.version = 11 : i64} {
  func.func @_nfe_kernel(%arg0: memref<64x6xbf16, #tpu.memory_space<vmem>>, %arg1: memref<8x6xbf16, #tpu.memory_space<vmem>>, %arg2: memref<6x256xbf16, #tpu.memory_space<vmem>>, %arg3: memref<1x256xf32, #tpu.memory_space<vmem>>, %arg4: memref<6x1024xbf16, #tpu.memory_space<vmem>>, %arg5: memref<1x1024xf32, #tpu.memory_space<vmem>>, %arg6: memref<128x512xbf16, #tpu.memory_space<vmem>>, %arg7: memref<128x512xbf16, #tpu.memory_space<vmem>>, %arg8: memref<256x64xbf16, #tpu.memory_space<vmem>>, %arg9: memref<1x64xf32, #tpu.memory_space<vmem>>, %arg10: memref<8x64xf32, #tpu.memory_space<vmem>>) attributes {dimension_semantics = [], scalar_prefetch = 0 : i64, scratch_operands = 0 : i64, tpu.core_type = #tpu.core_type<tc>} {
    %c0 = arith.constant 0 : index
    %c0_0 = arith.constant 0 : index
    %0 = vector.load %arg1[%c0, %c0_0] : memref<8x6xbf16, #tpu.memory_space<vmem>>, vector<8x6xbf16>
    %c0_1 = arith.constant 0 : index
    %c0_2 = arith.constant 0 : index
    %1 = vector.load %arg2[%c0_1, %c0_2] : memref<6x256xbf16, #tpu.memory_space<vmem>>, vector<6x256xbf16>
    %cst = arith.constant dense<0.000000e+00> : vector<8x256xf32>
    %2 = tpu.matmul %0, %1, %cst {dimension_numbers = #tpu.dot_dimension_numbers<[1], [0], [0], [1], [0, 0, 1, 1], [], []>} : vector<8x6xbf16>, vector<6x256xbf16>, vector<8x256xf32> -> vector<8x256xf32>
    %c0_3 = arith.constant 0 : index
    %c0_4 = arith.constant 0 : index
    %3 = vector.load %arg3[%c0_3, %c0_4] : memref<1x256xf32, #tpu.memory_space<vmem>>, vector<1x256xf32>
    %4 = vector.broadcast %3 : vector<1x256xf32> to vector<8x256xf32>
    %5 = arith.addf %2, %4 : vector<8x256xf32>
    %6 = vector.extract_strided_slice %5 {offsets = [0, 0], sizes = [8, 128], strides = [1, 1]} : vector<8x256xf32> to vector<8x128xf32>
    %7 = vector.extract_strided_slice %5 {offsets = [0, 128], sizes = [8, 128], strides = [1, 1]} : vector<8x256xf32> to vector<8x128xf32>
    %c0_5 = arith.constant 0 : index
    %c0_6 = arith.constant 0 : index
    %8 = vector.load %arg0[%c0_5, %c0_6] : memref<64x6xbf16, #tpu.memory_space<vmem>>, vector<64x6xbf16>
    %c0_7 = arith.constant 0 : index
    %c0_8 = arith.constant 0 : index
    %9 = vector.load %arg4[%c0_7, %c0_8] : memref<6x1024xbf16, #tpu.memory_space<vmem>>, vector<6x1024xbf16>
    %cst_9 = arith.constant dense<0.000000e+00> : vector<64x1024xf32>
    %10 = tpu.matmul %8, %9, %cst_9 {dimension_numbers = #tpu.dot_dimension_numbers<[1], [0], [0], [1], [0, 0, 1, 1], [], []>} : vector<64x6xbf16>, vector<6x1024xbf16>, vector<64x1024xf32> -> vector<64x1024xf32>
    %c0_10 = arith.constant 0 : index
    %c0_11 = arith.constant 0 : index
    %11 = vector.load %arg5[%c0_10, %c0_11] : memref<1x1024xf32, #tpu.memory_space<vmem>>, vector<1x1024xf32>
    %12 = vector.broadcast %11 : vector<1x1024xf32> to vector<64x1024xf32>
    %13 = arith.addf %10, %12 : vector<64x1024xf32>
    %c0_12 = arith.constant 0 : index
    %c0_13 = arith.constant 0 : index
    %14 = vector.load %arg6[%c0_12, %c0_13] : memref<128x512xbf16, #tpu.memory_space<vmem>>, vector<128x512xbf16>
    %c0_14 = arith.constant 0 : index
    %c0_15 = arith.constant 0 : index
    %15 = vector.load %arg7[%c0_14, %c0_15] : memref<128x512xbf16, #tpu.memory_space<vmem>>, vector<128x512xbf16>
    %16 = vector.extract_strided_slice %13 {offsets = [56, 512], sizes = [8, 512], strides = [1, 1]} : vector<64x1024xf32> to vector<8x512xf32>
    %17 = arith.truncf %6 : vector<8x128xf32> to vector<8x128xbf16>
    %cst_16 = arith.constant dense<0.000000e+00> : vector<8x512xf32>
    %18 = tpu.matmul %17, %15, %cst_16 {dimension_numbers = #tpu.dot_dimension_numbers<[1], [0], [0], [1], [0, 0, 1, 1], [], []>} : vector<8x128xbf16>, vector<128x512xbf16>, vector<8x512xf32> -> vector<8x512xf32>
    %19 = arith.addf %16, %18 : vector<8x512xf32>
    %20 = vector.extract_strided_slice %19 {offsets = [0, 0], sizes = [8, 128], strides = [1, 1]} : vector<8x512xf32> to vector<8x128xf32>
    %21 = arith.negf %20 : vector<8x128xf32>
    %22 = math.exp %21 : vector<8x128xf32>
    %cst_17 = arith.constant 1.000000e+00 : f32
    %23 = vector.broadcast %cst_17 : f32 to vector<8x128xf32>
    %24 = arith.addf %23, %22 : vector<8x128xf32>
    %25 = arith.divf %23, %24 : vector<8x128xf32>
    %26 = vector.extract_strided_slice %19 {offsets = [0, 128], sizes = [8, 128], strides = [1, 1]} : vector<8x512xf32> to vector<8x128xf32>
    %27 = arith.negf %26 : vector<8x128xf32>
    %28 = math.exp %27 : vector<8x128xf32>
    %cst_18 = arith.constant 1.000000e+00 : f32
    %29 = vector.broadcast %cst_18 : f32 to vector<8x128xf32>
    %30 = arith.addf %29, %28 : vector<8x128xf32>
    %31 = arith.divf %29, %30 : vector<8x128xf32>
    %32 = vector.extract_strided_slice %19 {offsets = [0, 256], sizes = [8, 128], strides = [1, 1]} : vector<8x512xf32> to vector<8x128xf32>
    %33 = math.tanh %32 : vector<8x128xf32>
    %34 = vector.extract_strided_slice %19 {offsets = [0, 384], sizes = [8, 128], strides = [1, 1]} : vector<8x512xf32> to vector<8x128xf32>
    %35 = arith.negf %34 : vector<8x128xf32>
    %36 = math.exp %35 : vector<8x128xf32>
    %cst_19 = arith.constant 1.000000e+00 : f32
    %37 = vector.broadcast %cst_19 : f32 to vector<8x128xf32>
    %38 = arith.addf %37, %36 : vector<8x128xf32>
    %39 = arith.divf %37, %38 : vector<8x128xf32>
    %40 = arith.mulf %31, %7 : vector<8x128xf32>
    %41 = arith.mulf %25, %33 : vector<8x128xf32>
    %42 = arith.addf %40, %41 : vector<8x128xf32>
    %43 = math.tanh %42 : vector<8x128xf32>
    %44 = arith.mulf %39, %43 : vector<8x128xf32>
    %45 = vector.extract_strided_slice %13 {offsets = [0, 0], sizes = [8, 512], strides = [1, 1]} : vector<64x1024xf32> to vector<8x512xf32>
    %46 = arith.truncf %6 : vector<8x128xf32> to vector<8x128xbf16>
    %cst_20 = arith.constant dense<0.000000e+00> : vector<8x512xf32>
    %47 = tpu.matmul %46, %14, %cst_20 {dimension_numbers = #tpu.dot_dimension_numbers<[1], [0], [0], [1], [0, 0, 1, 1], [], []>} : vector<8x128xbf16>, vector<128x512xbf16>, vector<8x512xf32> -> vector<8x512xf32>
    %48 = arith.addf %45, %47 : vector<8x512xf32>
    %49 = vector.extract_strided_slice %48 {offsets = [0, 0], sizes = [8, 128], strides = [1, 1]} : vector<8x512xf32> to vector<8x128xf32>
    %50 = arith.negf %49 : vector<8x128xf32>
    %51 = math.exp %50 : vector<8x128xf32>
    %cst_21 = arith.constant 1.000000e+00 : f32
    %52 = vector.broadcast %cst_21 : f32 to vector<8x128xf32>
    %53 = arith.addf %52, %51 : vector<8x128xf32>
    %54 = arith.divf %52, %53 : vector<8x128xf32>
    %55 = vector.extract_strided_slice %48 {offsets = [0, 128], sizes = [8, 128], strides = [1, 1]} : vector<8x512xf32> to vector<8x128xf32>
    %56 = arith.negf %55 : vector<8x128xf32>
    %57 = math.exp %56 : vector<8x128xf32>
    %cst_22 = arith.constant 1.000000e+00 : f32
    %58 = vector.broadcast %cst_22 : f32 to vector<8x128xf32>
    %59 = arith.addf %58, %57 : vector<8x128xf32>
    %60 = arith.divf %58, %59 : vector<8x128xf32>
    %61 = vector.extract_strided_slice %48 {offsets = [0, 256], sizes = [8, 128], strides = [1, 1]} : vector<8x512xf32> to vector<8x128xf32>
    %62 = math.tanh %61 : vector<8x128xf32>
    %63 = vector.extract_strided_slice %48 {offsets = [0, 384], sizes = [8, 128], strides = [1, 1]} : vector<8x512xf32> to vector<8x128xf32>
    %64 = arith.negf %63 : vector<8x128xf32>
    %65 = math.exp %64 : vector<8x128xf32>
    %cst_23 = arith.constant 1.000000e+00 : f32
    %66 = vector.broadcast %cst_23 : f32 to vector<8x128xf32>
    %67 = arith.addf %66, %65 : vector<8x128xf32>
    %68 = arith.divf %66, %67 : vector<8x128xf32>
    %69 = arith.mulf %60, %7 : vector<8x128xf32>
    %70 = arith.mulf %54, %62 : vector<8x128xf32>
    %71 = arith.addf %69, %70 : vector<8x128xf32>
    %72 = math.tanh %71 : vector<8x128xf32>
    %73 = arith.mulf %68, %72 : vector<8x128xf32>
    %74 = vector.extract_strided_slice %13 {offsets = [8, 0], sizes = [8, 512], strides = [1, 1]} : vector<64x1024xf32> to vector<8x512xf32>
    %75 = arith.truncf %73 : vector<8x128xf32> to vector<8x128xbf16>
    %cst_24 = arith.constant dense<0.000000e+00> : vector<8x512xf32>
    %76 = tpu.matmul %75, %14, %cst_24 {dimension_numbers = #tpu.dot_dimension_numbers<[1], [0], [0], [1], [0, 0, 1, 1], [], []>} : vector<8x128xbf16>, vector<128x512xbf16>, vector<8x512xf32> -> vector<8x512xf32>
    %77 = arith.addf %74, %76 : vector<8x512xf32>
    %78 = vector.extract_strided_slice %77 {offsets = [0, 0], sizes = [8, 128], strides = [1, 1]} : vector<8x512xf32> to vector<8x128xf32>
    %79 = arith.negf %78 : vector<8x128xf32>
    %80 = math.exp %79 : vector<8x128xf32>
    %cst_25 = arith.constant 1.000000e+00 : f32
    %81 = vector.broadcast %cst_25 : f32 to vector<8x128xf32>
    %82 = arith.addf %81, %80 : vector<8x128xf32>
    %83 = arith.divf %81, %82 : vector<8x128xf32>
    %84 = vector.extract_strided_slice %77 {offsets = [0, 128], sizes = [8, 128], strides = [1, 1]} : vector<8x512xf32> to vector<8x128xf32>
    %85 = arith.negf %84 : vector<8x128xf32>
    %86 = math.exp %85 : vector<8x128xf32>
    %cst_26 = arith.constant 1.000000e+00 : f32
    %87 = vector.broadcast %cst_26 : f32 to vector<8x128xf32>
    %88 = arith.addf %87, %86 : vector<8x128xf32>
    %89 = arith.divf %87, %88 : vector<8x128xf32>
    %90 = vector.extract_strided_slice %77 {offsets = [0, 256], sizes = [8, 128], strides = [1, 1]} : vector<8x512xf32> to vector<8x128xf32>
    %91 = math.tanh %90 : vector<8x128xf32>
    %92 = vector.extract_strided_slice %77 {offsets = [0, 384], sizes = [8, 128], strides = [1, 1]} : vector<8x512xf32> to vector<8x128xf32>
    %93 = arith.negf %92 : vector<8x128xf32>
    %94 = math.exp %93 : vector<8x128xf32>
    %cst_27 = arith.constant 1.000000e+00 : f32
    %95 = vector.broadcast %cst_27 : f32 to vector<8x128xf32>
    %96 = arith.addf %95, %94 : vector<8x128xf32>
    %97 = arith.divf %95, %96 : vector<8x128xf32>
    %98 = arith.mulf %89, %71 : vector<8x128xf32>
    %99 = arith.mulf %83, %91 : vector<8x128xf32>
    %100 = arith.addf %98, %99 : vector<8x128xf32>
    %101 = math.tanh %100 : vector<8x128xf32>
    %102 = arith.mulf %97, %101 : vector<8x128xf32>
    %103 = vector.extract_strided_slice %13 {offsets = [16, 0], sizes = [8, 512], strides = [1, 1]} : vector<64x1024xf32> to vector<8x512xf32>
    %104 = arith.truncf %102 : vector<8x128xf32> to vector<8x128xbf16>
    %cst_28 = arith.constant dense<0.000000e+00> : vector<8x512xf32>
    %105 = tpu.matmul %104, %14, %cst_28 {dimension_numbers = #tpu.dot_dimension_numbers<[1], [0], [0], [1], [0, 0, 1, 1], [], []>} : vector<8x128xbf16>, vector<128x512xbf16>, vector<8x512xf32> -> vector<8x512xf32>
    %106 = arith.addf %103, %105 : vector<8x512xf32>
    %107 = vector.extract_strided_slice %106 {offsets = [0, 0], sizes = [8, 128], strides = [1, 1]} : vector<8x512xf32> to vector<8x128xf32>
    %108 = arith.negf %107 : vector<8x128xf32>
    %109 = math.exp %108 : vector<8x128xf32>
    %cst_29 = arith.constant 1.000000e+00 : f32
    %110 = vector.broadcast %cst_29 : f32 to vector<8x128xf32>
    %111 = arith.addf %110, %109 : vector<8x128xf32>
    %112 = arith.divf %110, %111 : vector<8x128xf32>
    %113 = vector.extract_strided_slice %106 {offsets = [0, 128], sizes = [8, 128], strides = [1, 1]} : vector<8x512xf32> to vector<8x128xf32>
    %114 = arith.negf %113 : vector<8x128xf32>
    %115 = math.exp %114 : vector<8x128xf32>
    %cst_30 = arith.constant 1.000000e+00 : f32
    %116 = vector.broadcast %cst_30 : f32 to vector<8x128xf32>
    %117 = arith.addf %116, %115 : vector<8x128xf32>
    %118 = arith.divf %116, %117 : vector<8x128xf32>
    %119 = vector.extract_strided_slice %106 {offsets = [0, 256], sizes = [8, 128], strides = [1, 1]} : vector<8x512xf32> to vector<8x128xf32>
    %120 = math.tanh %119 : vector<8x128xf32>
    %121 = vector.extract_strided_slice %106 {offsets = [0, 384], sizes = [8, 128], strides = [1, 1]} : vector<8x512xf32> to vector<8x128xf32>
    %122 = arith.negf %121 : vector<8x128xf32>
    %123 = math.exp %122 : vector<8x128xf32>
    %cst_31 = arith.constant 1.000000e+00 : f32
    %124 = vector.broadcast %cst_31 : f32 to vector<8x128xf32>
    %125 = arith.addf %124, %123 : vector<8x128xf32>
    %126 = arith.divf %124, %125 : vector<8x128xf32>
    %127 = arith.mulf %118, %100 : vector<8x128xf32>
    %128 = arith.mulf %112, %120 : vector<8x128xf32>
    %129 = arith.addf %127, %128 : vector<8x128xf32>
    %130 = math.tanh %129 : vector<8x128xf32>
    %131 = arith.mulf %126, %130 : vector<8x128xf32>
    %132 = vector.extract_strided_slice %13 {offsets = [24, 0], sizes = [8, 512], strides = [1, 1]} : vector<64x1024xf32> to vector<8x512xf32>
    %133 = arith.truncf %131 : vector<8x128xf32> to vector<8x128xbf16>
    %cst_32 = arith.constant dense<0.000000e+00> : vector<8x512xf32>
    %134 = tpu.matmul %133, %14, %cst_32 {dimension_numbers = #tpu.dot_dimension_numbers<[1], [0], [0], [1], [0, 0, 1, 1], [], []>} : vector<8x128xbf16>, vector<128x512xbf16>, vector<8x512xf32> -> vector<8x512xf32>
    %135 = arith.addf %132, %134 : vector<8x512xf32>
    %136 = vector.extract_strided_slice %135 {offsets = [0, 0], sizes = [8, 128], strides = [1, 1]} : vector<8x512xf32> to vector<8x128xf32>
    %137 = arith.negf %136 : vector<8x128xf32>
    %138 = math.exp %137 : vector<8x128xf32>
    %cst_33 = arith.constant 1.000000e+00 : f32
    %139 = vector.broadcast %cst_33 : f32 to vector<8x128xf32>
    %140 = arith.addf %139, %138 : vector<8x128xf32>
    %141 = arith.divf %139, %140 : vector<8x128xf32>
    %142 = vector.extract_strided_slice %135 {offsets = [0, 128], sizes = [8, 128], strides = [1, 1]} : vector<8x512xf32> to vector<8x128xf32>
    %143 = arith.negf %142 : vector<8x128xf32>
    %144 = math.exp %143 : vector<8x128xf32>
    %cst_34 = arith.constant 1.000000e+00 : f32
    %145 = vector.broadcast %cst_34 : f32 to vector<8x128xf32>
    %146 = arith.addf %145, %144 : vector<8x128xf32>
    %147 = arith.divf %145, %146 : vector<8x128xf32>
    %148 = vector.extract_strided_slice %135 {offsets = [0, 256], sizes = [8, 128], strides = [1, 1]} : vector<8x512xf32> to vector<8x128xf32>
    %149 = math.tanh %148 : vector<8x128xf32>
    %150 = vector.extract_strided_slice %135 {offsets = [0, 384], sizes = [8, 128], strides = [1, 1]} : vector<8x512xf32> to vector<8x128xf32>
    %151 = arith.negf %150 : vector<8x128xf32>
    %152 = math.exp %151 : vector<8x128xf32>
    %cst_35 = arith.constant 1.000000e+00 : f32
    %153 = vector.broadcast %cst_35 : f32 to vector<8x128xf32>
    %154 = arith.addf %153, %152 : vector<8x128xf32>
    %155 = arith.divf %153, %154 : vector<8x128xf32>
    %156 = arith.mulf %147, %129 : vector<8x128xf32>
    %157 = arith.mulf %141, %149 : vector<8x128xf32>
    %158 = arith.addf %156, %157 : vector<8x128xf32>
    %159 = math.tanh %158 : vector<8x128xf32>
    %160 = arith.mulf %155, %159 : vector<8x128xf32>
    %161 = vector.extract_strided_slice %13 {offsets = [32, 0], sizes = [8, 512], strides = [1, 1]} : vector<64x1024xf32> to vector<8x512xf32>
    %162 = arith.truncf %160 : vector<8x128xf32> to vector<8x128xbf16>
    %cst_36 = arith.constant dense<0.000000e+00> : vector<8x512xf32>
    %163 = tpu.matmul %162, %14, %cst_36 {dimension_numbers = #tpu.dot_dimension_numbers<[1], [0], [0], [1], [0, 0, 1, 1], [], []>} : vector<8x128xbf16>, vector<128x512xbf16>, vector<8x512xf32> -> vector<8x512xf32>
    %164 = arith.addf %161, %163 : vector<8x512xf32>
    %165 = vector.extract_strided_slice %164 {offsets = [0, 0], sizes = [8, 128], strides = [1, 1]} : vector<8x512xf32> to vector<8x128xf32>
    %166 = arith.negf %165 : vector<8x128xf32>
    %167 = math.exp %166 : vector<8x128xf32>
    %cst_37 = arith.constant 1.000000e+00 : f32
    %168 = vector.broadcast %cst_37 : f32 to vector<8x128xf32>
    %169 = arith.addf %168, %167 : vector<8x128xf32>
    %170 = arith.divf %168, %169 : vector<8x128xf32>
    %171 = vector.extract_strided_slice %164 {offsets = [0, 128], sizes = [8, 128], strides = [1, 1]} : vector<8x512xf32> to vector<8x128xf32>
    %172 = arith.negf %171 : vector<8x128xf32>
    %173 = math.exp %172 : vector<8x128xf32>
    %cst_38 = arith.constant 1.000000e+00 : f32
    %174 = vector.broadcast %cst_38 : f32 to vector<8x128xf32>
    %175 = arith.addf %174, %173 : vector<8x128xf32>
    %176 = arith.divf %174, %175 : vector<8x128xf32>
    %177 = vector.extract_strided_slice %164 {offsets = [0, 256], sizes = [8, 128], strides = [1, 1]} : vector<8x512xf32> to vector<8x128xf32>
    %178 = math.tanh %177 : vector<8x128xf32>
    %179 = vector.extract_strided_slice %164 {offsets = [0, 384], sizes = [8, 128], strides = [1, 1]} : vector<8x512xf32> to vector<8x128xf32>
    %180 = arith.negf %179 : vector<8x128xf32>
    %181 = math.exp %180 : vector<8x128xf32>
    %cst_39 = arith.constant 1.000000e+00 : f32
    %182 = vector.broadcast %cst_39 : f32 to vector<8x128xf32>
    %183 = arith.addf %182, %181 : vector<8x128xf32>
    %184 = arith.divf %182, %183 : vector<8x128xf32>
    %185 = arith.mulf %176, %158 : vector<8x128xf32>
    %186 = arith.mulf %170, %178 : vector<8x128xf32>
    %187 = arith.addf %185, %186 : vector<8x128xf32>
    %188 = math.tanh %187 : vector<8x128xf32>
    %189 = arith.mulf %184, %188 : vector<8x128xf32>
    %190 = vector.extract_strided_slice %13 {offsets = [40, 0], sizes = [8, 512], strides = [1, 1]} : vector<64x1024xf32> to vector<8x512xf32>
    %191 = arith.truncf %189 : vector<8x128xf32> to vector<8x128xbf16>
    %cst_40 = arith.constant dense<0.000000e+00> : vector<8x512xf32>
    %192 = tpu.matmul %191, %14, %cst_40 {dimension_numbers = #tpu.dot_dimension_numbers<[1], [0], [0], [1], [0, 0, 1, 1], [], []>} : vector<8x128xbf16>, vector<128x512xbf16>, vector<8x512xf32> -> vector<8x512xf32>
    %193 = arith.addf %190, %192 : vector<8x512xf32>
    %194 = vector.extract_strided_slice %193 {offsets = [0, 0], sizes = [8, 128], strides = [1, 1]} : vector<8x512xf32> to vector<8x128xf32>
    %195 = arith.negf %194 : vector<8x128xf32>
    %196 = math.exp %195 : vector<8x128xf32>
    %cst_41 = arith.constant 1.000000e+00 : f32
    %197 = vector.broadcast %cst_41 : f32 to vector<8x128xf32>
    %198 = arith.addf %197, %196 : vector<8x128xf32>
    %199 = arith.divf %197, %198 : vector<8x128xf32>
    %200 = vector.extract_strided_slice %193 {offsets = [0, 128], sizes = [8, 128], strides = [1, 1]} : vector<8x512xf32> to vector<8x128xf32>
    %201 = arith.negf %200 : vector<8x128xf32>
    %202 = math.exp %201 : vector<8x128xf32>
    %cst_42 = arith.constant 1.000000e+00 : f32
    %203 = vector.broadcast %cst_42 : f32 to vector<8x128xf32>
    %204 = arith.addf %203, %202 : vector<8x128xf32>
    %205 = arith.divf %203, %204 : vector<8x128xf32>
    %206 = vector.extract_strided_slice %193 {offsets = [0, 256], sizes = [8, 128], strides = [1, 1]} : vector<8x512xf32> to vector<8x128xf32>
    %207 = math.tanh %206 : vector<8x128xf32>
    %208 = vector.extract_strided_slice %193 {offsets = [0, 384], sizes = [8, 128], strides = [1, 1]} : vector<8x512xf32> to vector<8x128xf32>
    %209 = arith.negf %208 : vector<8x128xf32>
    %210 = math.exp %209 : vector<8x128xf32>
    %cst_43 = arith.constant 1.000000e+00 : f32
    %211 = vector.broadcast %cst_43 : f32 to vector<8x128xf32>
    %212 = arith.addf %211, %210 : vector<8x128xf32>
    %213 = arith.divf %211, %212 : vector<8x128xf32>
    %214 = arith.mulf %205, %187 : vector<8x128xf32>
    %215 = arith.mulf %199, %207 : vector<8x128xf32>
    %216 = arith.addf %214, %215 : vector<8x128xf32>
    %217 = math.tanh %216 : vector<8x128xf32>
    %218 = arith.mulf %213, %217 : vector<8x128xf32>
    %219 = vector.extract_strided_slice %13 {offsets = [48, 0], sizes = [8, 512], strides = [1, 1]} : vector<64x1024xf32> to vector<8x512xf32>
    %220 = arith.truncf %218 : vector<8x128xf32> to vector<8x128xbf16>
    %cst_44 = arith.constant dense<0.000000e+00> : vector<8x512xf32>
    %221 = tpu.matmul %220, %14, %cst_44 {dimension_numbers = #tpu.dot_dimension_numbers<[1], [0], [0], [1], [0, 0, 1, 1], [], []>} : vector<8x128xbf16>, vector<128x512xbf16>, vector<8x512xf32> -> vector<8x512xf32>
    %222 = arith.addf %219, %221 : vector<8x512xf32>
    %223 = vector.extract_strided_slice %222 {offsets = [0, 0], sizes = [8, 128], strides = [1, 1]} : vector<8x512xf32> to vector<8x128xf32>
    %224 = arith.negf %223 : vector<8x128xf32>
    %225 = math.exp %224 : vector<8x128xf32>
    %cst_45 = arith.constant 1.000000e+00 : f32
    %226 = vector.broadcast %cst_45 : f32 to vector<8x128xf32>
    %227 = arith.addf %226, %225 : vector<8x128xf32>
    %228 = arith.divf %226, %227 : vector<8x128xf32>
    %229 = vector.extract_strided_slice %222 {offsets = [0, 128], sizes = [8, 128], strides = [1, 1]} : vector<8x512xf32> to vector<8x128xf32>
    %230 = arith.negf %229 : vector<8x128xf32>
    %231 = math.exp %230 : vector<8x128xf32>
    %cst_46 = arith.constant 1.000000e+00 : f32
    %232 = vector.broadcast %cst_46 : f32 to vector<8x128xf32>
    %233 = arith.addf %232, %231 : vector<8x128xf32>
    %234 = arith.divf %232, %233 : vector<8x128xf32>
    %235 = vector.extract_strided_slice %222 {offsets = [0, 256], sizes = [8, 128], strides = [1, 1]} : vector<8x512xf32> to vector<8x128xf32>
    %236 = math.tanh %235 : vector<8x128xf32>
    %237 = vector.extract_strided_slice %222 {offsets = [0, 384], sizes = [8, 128], strides = [1, 1]} : vector<8x512xf32> to vector<8x128xf32>
    %238 = arith.negf %237 : vector<8x128xf32>
    %239 = math.exp %238 : vector<8x128xf32>
    %cst_47 = arith.constant 1.000000e+00 : f32
    %240 = vector.broadcast %cst_47 : f32 to vector<8x128xf32>
    %241 = arith.addf %240, %239 : vector<8x128xf32>
    %242 = arith.divf %240, %241 : vector<8x128xf32>
    %243 = arith.mulf %234, %216 : vector<8x128xf32>
    %244 = arith.mulf %228, %236 : vector<8x128xf32>
    %245 = arith.addf %243, %244 : vector<8x128xf32>
    %246 = math.tanh %245 : vector<8x128xf32>
    %247 = arith.mulf %242, %246 : vector<8x128xf32>
    %248 = vector.extract_strided_slice %13 {offsets = [56, 0], sizes = [8, 512], strides = [1, 1]} : vector<64x1024xf32> to vector<8x512xf32>
    %249 = arith.truncf %247 : vector<8x128xf32> to vector<8x128xbf16>
    %cst_48 = arith.constant dense<0.000000e+00> : vector<8x512xf32>
    %250 = tpu.matmul %249, %14, %cst_48 {dimension_numbers = #tpu.dot_dimension_numbers<[1], [0], [0], [1], [0, 0, 1, 1], [], []>} : vector<8x128xbf16>, vector<128x512xbf16>, vector<8x512xf32> -> vector<8x512xf32>
    %251 = arith.addf %248, %250 : vector<8x512xf32>
    %252 = vector.extract_strided_slice %251 {offsets = [0, 0], sizes = [8, 128], strides = [1, 1]} : vector<8x512xf32> to vector<8x128xf32>
    %253 = arith.negf %252 : vector<8x128xf32>
    %254 = math.exp %253 : vector<8x128xf32>
    %cst_49 = arith.constant 1.000000e+00 : f32
    %255 = vector.broadcast %cst_49 : f32 to vector<8x128xf32>
    %256 = arith.addf %255, %254 : vector<8x128xf32>
    %257 = arith.divf %255, %256 : vector<8x128xf32>
    %258 = vector.extract_strided_slice %251 {offsets = [0, 128], sizes = [8, 128], strides = [1, 1]} : vector<8x512xf32> to vector<8x128xf32>
    %259 = arith.negf %258 : vector<8x128xf32>
    %260 = math.exp %259 : vector<8x128xf32>
    %cst_50 = arith.constant 1.000000e+00 : f32
    %261 = vector.broadcast %cst_50 : f32 to vector<8x128xf32>
    %262 = arith.addf %261, %260 : vector<8x128xf32>
    %263 = arith.divf %261, %262 : vector<8x128xf32>
    %264 = vector.extract_strided_slice %251 {offsets = [0, 256], sizes = [8, 128], strides = [1, 1]} : vector<8x512xf32> to vector<8x128xf32>
    %265 = math.tanh %264 : vector<8x128xf32>
    %266 = vector.extract_strided_slice %251 {offsets = [0, 384], sizes = [8, 128], strides = [1, 1]} : vector<8x512xf32> to vector<8x128xf32>
    %267 = arith.negf %266 : vector<8x128xf32>
    %268 = math.exp %267 : vector<8x128xf32>
    %cst_51 = arith.constant 1.000000e+00 : f32
    %269 = vector.broadcast %cst_51 : f32 to vector<8x128xf32>
    %270 = arith.addf %269, %268 : vector<8x128xf32>
    %271 = arith.divf %269, %270 : vector<8x128xf32>
    %272 = arith.mulf %263, %245 : vector<8x128xf32>
    %273 = arith.mulf %257, %265 : vector<8x128xf32>
    %274 = arith.addf %272, %273 : vector<8x128xf32>
    %275 = math.tanh %274 : vector<8x128xf32>
    %276 = arith.mulf %271, %275 : vector<8x128xf32>
    %277 = tpu.concatenate %276, %44 in 1 : vector<8x128xf32>, vector<8x128xf32> -> vector<8x256xf32>
    %278 = arith.truncf %277 : vector<8x256xf32> to vector<8x256xbf16>
    %c0_52 = arith.constant 0 : index
    %c0_53 = arith.constant 0 : index
    %279 = vector.load %arg8[%c0_52, %c0_53] : memref<256x64xbf16, #tpu.memory_space<vmem>>, vector<256x64xbf16>
    %cst_54 = arith.constant dense<0.000000e+00> : vector<8x64xf32>
    %280 = tpu.matmul %278, %279, %cst_54 {dimension_numbers = #tpu.dot_dimension_numbers<[1], [0], [0], [1], [0, 0, 1, 1], [], []>} : vector<8x256xbf16>, vector<256x64xbf16>, vector<8x64xf32> -> vector<8x64xf32>
    %c0_55 = arith.constant 0 : index
    %c0_56 = arith.constant 0 : index
    %281 = vector.load %arg9[%c0_55, %c0_56] : memref<1x64xf32, #tpu.memory_space<vmem>>, vector<1x64xf32>
    %282 = vector.broadcast %281 : vector<1x64xf32> to vector<8x64xf32>
    %283 = arith.addf %280, %282 : vector<8x64xf32>
    %c0_57 = arith.constant 0 : index
    %c0_58 = arith.constant 0 : index
    %284 = vector.load %arg10[%c0_57, %c0_58] : memref<8x64xf32, #tpu.memory_space<vmem>>, vector<8x64xf32>
    tpu.vector_store %arg10[%c0_57, %c0_58], %283 {strides = array<i32>} : memref<8x64xf32, #tpu.memory_space<vmem>>, vector<8x64xf32>,
    return
  }
}

</mosaic_0001>

<llo_original>
// kernel: tpu_custom_call.1
$region0: #{tpu_custom_call.1}
  #allocation0 [shape = 'u32[]', space=smem, size = 0x4, offset = 0x4, fixed_abs, tag = 'smem constant byte address 0x4 - core index']
  #allocation1 [shape = 'u32[144,128]{1,0:T(1,128)}', space=vmem, size = 0x12000, scoped, tag = 'internal scratch']
  %s0 = inlined_call_operand.vmem [shape: bf16[64,6], index: 0, kind: input, shape index: {}]
  %s1 = inlined_call_operand.vmem [shape: bf16[8,6], index: 1, kind: input, shape index: {}]
  %s2 = inlined_call_operand.vmem [shape: bf16[6,256], index: 2, kind: input, shape index: {}]
  %s3 = inlined_call_operand.vmem [shape: f32[1,256], index: 3, kind: input, shape index: {}]
  %s4 = inlined_call_operand.vmem [shape: bf16[6,1024], index: 4, kind: input, shape index: {}]
  %s5 = inlined_call_operand.vmem [shape: f32[1,1024], index: 5, kind: input, shape index: {}]
  %s6 = inlined_call_operand.hbm [shape: bf16[128,512], index: 6, kind: input, shape index: {}]
  %s7 = inlined_call_operand.hbm [shape: bf16[128,512], index: 7, kind: input, shape index: {}]
  %s8 = inlined_call_operand.vmem [shape: bf16[256,64], index: 8, kind: input, shape index: {}]
  %s9 = inlined_call_operand.vmem [shape: f32[1,64], index: 9, kind: input, shape index: {}]
  %s10 = inlined_call_operand.hbm [shape: f32[8,64], index: 10, kind: output, shape index: {}]
  %s11 = sld [smem:[#allocation0]]
  $region58: #{tpu_custom_call.1} parent=0
    _
  %s13 = ssub.s32 1, %s11
  %s14 = scalar_select 0, %s13, %s11
  $region1: #{tpu_custom_call.1} parent=0
    #allocation2 [shape = 'u8[131072]{0}', space=vmem, size = 0x20000, scoped, tag = 'input window, operand 6, single buffered']
    #allocation3 [shape = 's32[1]{0}', space=sflag, size = 0x4, scoped, tag = 'scoped memory for tpu_custom_call.1']
    #allocation4 [shape = 's32[1]{0}', space=sflag, size = 0x4, scoped, tag = 'scoped memory for tpu_custom_call.1']
    #allocation5 [shape = 'u8[131072]{0}', space=vmem, size = 0x20000, scoped, tag = 'input window, operand 7, single buffered']
    #allocation6 [shape = 's32[1]{0}', space=sflag, size = 0x4, scoped, tag = 'scoped memory for tpu_custom_call.1']
    #allocation7 [shape = 'u8[4096]{0}', space=vmem, size = 0x1000, scoped, tag = 'output window, operand 0, single buffered']
    %15 = vsyncpa [#allocation3], 0
    %16 = vsyncpa [#allocation6], 0
    %17 = vsyncpa [#allocation4], 0
    // Predicated region
    $region2: #{tpu_custom_call.1} parent=1 // pred_check
      _
    $region3: #{tpu_custom_call.1} parent=1 // pred_check_branch
      %19 = sbr.rel (0) target = $region5
    $region4: #{tpu_custom_call.1} parent=1 // pred_region
      _
    $region5: #{tpu_custom_call.1} parent=1 // pred_fallthru
      _
    // Predicated region
    $region6: #{tpu_custom_call.1} parent=1 // pred_check
      _
    $region7: #{tpu_custom_call.1} parent=1 // pred_check_branch
      %21 = sbr.rel (0) target = $region9
    $region8: #{tpu_custom_call.1} parent=1 // pred_region
      _
    $region9: #{tpu_custom_call.1} parent=1 // pred_fallthru
      _
    // Predicated region
    $region10: #{tpu_custom_call.1} parent=1 // pred_check
      _
    $region11: #{tpu_custom_call.1} parent=1 // pred_check_branch
      %23 = sbr.rel (0) target = $region13
    $region12: #{tpu_custom_call.1} parent=1 // pred_region
      _
    $region13: #{tpu_custom_call.1} parent=1 // pred_fallthru
      _
    // Predicated region
    $region14: #{tpu_custom_call.1} parent=1 // pred_check
      _
    $region15: #{tpu_custom_call.1} parent=1 // pred_check_branch
      %25 = sbr.rel (0) target = $region17
    $region16: #{tpu_custom_call.1} parent=1 // pred_region
      _
    $region17: #{tpu_custom_call.1} parent=1 // pred_fallthru
      _
    // Predicated region
    $region18: #{tpu_custom_call.1} parent=1 // pred_check
      _
    $region19: #{tpu_custom_call.1} parent=1 // pred_check_branch
      %27 = sbr.rel (0) target = $region21
    $region20: #{tpu_custom_call.1} parent=1 // pred_region
      _
    $region21: #{tpu_custom_call.1} parent=1 // pred_fallthru
      _
    // Predicated region
    $region22: #{tpu_custom_call.1} parent=1 // pred_check
      _
    $region23: #{tpu_custom_call.1} parent=1 // pred_check_branch
      %29 = sbr.rel (0) target = $region25
    $region24: #{tpu_custom_call.1} parent=1 // pred_region
      _
    $region25: #{tpu_custom_call.1} parent=1 // pred_fallthru
      _
    // Predicated region
    $region26: #{tpu_custom_call.1} parent=1 // pred_check
      _
    $region27: #{tpu_custom_call.1} parent=1 // pred_check_branch
      %31 = sbr.rel (0) target = $region29
    $region28: #{tpu_custom_call.1} parent=1 // pred_region
      %s33 = ssub.s32 4096, 4096
      %34 = vsyncadd [#allocation3], %s33
      %s35 = sshll.u32 [#allocation2], 4
      %s36 = int_to_ptr.vmem [resolvable:$true] %s35
      %41 = dma.hbm_to_vmem [thread:$0]  %s6, 4096, %s36, [#allocation3], 256, 256, 16
    $region29: #{tpu_custom_call.1} parent=1 // pred_fallthru
      _
    // Predicated region
    $region30: #{tpu_custom_call.1} parent=1 // pred_check
      _
    $region31: #{tpu_custom_call.1} parent=1 // pred_check_branch
      %43 = sbr.rel (0) target = $region33
    $region32: #{tpu_custom_call.1} parent=1 // pred_region
      %s45 = ssub.s32 4096, 4096
      %46 = vsyncadd [#allocation6], %s45
      %s47 = sshll.u32 [#allocation5], 4
      %s48 = int_to_ptr.vmem [resolvable:$true] %s47
      %53 = dma.hbm_to_vmem [thread:$0]  %s7, 4096, %s48, [#allocation6], 256, 256, 16
    $region33: #{tpu_custom_call.1} parent=1 // pred_fallthru
      _
    // Predicated region
    $region34: #{tpu_custom_call.1} parent=1 // pred_check
      _
    $region35: #{tpu_custom_call.1} parent=1 // pred_check_branch
      %55 = sbr.rel (0) target = $region37
    $region36: #{tpu_custom_call.1} parent=1 // pred_region
      _
    $region37: #{tpu_custom_call.1} parent=1 // pred_fallthru
      _
    // Predicated region
    $region38: #{tpu_custom_call.1} parent=1 // pred_check
      _
    $region39: #{tpu_custom_call.1} parent=1 // pred_check_branch
      %57 = sbr.rel (0) target = $region41
    $region40: #{tpu_custom_call.1} parent=1 // pred_region
      _
    $region41: #{tpu_custom_call.1} parent=1 // pred_fallthru
      _
    // Predicated region
    $region42: #{tpu_custom_call.1} parent=1 // pred_check
      _
    $region43: #{tpu_custom_call.1} parent=1 // pred_check_branch
      %59 = sbr.rel (0) target = $region45
    $region44: #{tpu_custom_call.1} parent=1 // pred_region
      %60 = dma.done [#allocation3], 4096
    $region45: #{tpu_custom_call.1} parent=1 // pred_fallthru
      _
    // Predicated region
    $region46: #{tpu_custom_call.1} parent=1 // pred_check
      _
    $region47: #{tpu_custom_call.1} parent=1 // pred_check_branch
      %62 = sbr.rel (0) target = $region49
    $region48: #{tpu_custom_call.1} parent=1 // pred_region
      %63 = dma.done [#allocation6], 4096
    $region49: #{tpu_custom_call.1} parent=1 // pred_fallthru
      _
    %v65 = vld [vmem:[%s1] sm:$0xf]
    %v66 = vld [vmem:[%s2] sm:$0x77]
    %v67 = vld [vmem:[%s3] sm:$0x3]
    %v69 = vlaneseq
    %v70 = vshrl.u32 %v69, 7
    %v71 = vsub.s32 0, %v70
    %v72 = vrot.slane %v67, %v71
    %v73 = vlaneseq
    %v74 = vshrl.u32 %v73, 7
    %v75 = vsub.s32 1, %v74
    %v76 = vrot.slane %v67, %v75
    %v80 = vunpack.c.l.b16 %v66
    %v81 = vunpack.c.h.b16 %v66
    %v82 = vpack.c.b16 %v80, %v80
    %v83 = vpack.c.b16 %v81, %v81
    %vm84 = vcmask 48128
    %v86 = vsel %vm84, %v65, 0
    %vm88 = vcmask 1042432
    %v90 = vsel %vm88, %v82, 0
    %v93 = vsel %vm88, %v83, 0
    %95 = vmatprep.subr.bf16.mxu0 %v93
    %96 = vmatpush1.bf16.msra.mxu0 %v90
    %97 = vmatprep.subr.bf16.mxu0 0
    %98 = vmatpush1.bf16.msra.mxu0 0
    %99 = vmatprep.subr.bf16.mxu0 0
    %100 = vmatpush1.bf16.msra.mxu0 0
    %101 = vmatprep.subr.bf16.mxu0 0
    %102 = vmatpush1.bf16.msra.mxu0 0
    %103 = vmatprep.subr.bf16.mxu0 0
    %104 = vmatpush1.bf16.msra.mxu0 0
    %105 = vmatprep.subr.bf16.mxu0 0
    %106 = vmatpush1.bf16.msra.mxu0 0
    %107 = vmatprep.subr.bf16.mxu0 0
    %108 = vmatpush1.bf16.msra.mxu0 0
    %109 = vmatprep.subr.bf16.mxu0 0
    %110 = vmatpush1.bf16.msra.mxu0 0
    %111 = vmatprep.subr.bf16.mxu0 0
    %112 = vmatpush1.bf16.msra.mxu0 0
    %113 = vmatprep.subr.bf16.mxu0 0
    %114 = vmatpush1.bf16.msra.mxu0 0
    %115 = vmatprep.subr.bf16.mxu0 0
    %116 = vmatpush1.bf16.msra.mxu0 0
    %117 = vmatprep.subr.bf16.mxu0 0
    %118 = vmatpush1.bf16.msra.mxu0 0
    %119 = vmatprep.subr.bf16.mxu0 0
    %120 = vmatpush1.bf16.msra.mxu0 0
    %121 = vmatprep.subr.bf16.mxu0 0
    %122 = vmatpush1.bf16.msra.mxu0 0
    %123 = vmatprep.subr.bf16.mxu0 0
    %124 = vmatpush1.bf16.msra.mxu0 0
    %125 = vmatprep.subr.bf16.mxu0 0
    %126 = vmatpush1.bf16.msra.mxu0 0
    %127 = vmatprep.mubr.bf16.mxu0 0
    %128 = vmatmul.mubr.bf16.gmra.mrb[0].mxu0 %v86
    %v129 = vpop.f32.mrb[0].mxu0
    %v130 = vadd.f32 %v72, %v129
    %v131 = vpop.f32.mrb[0].mxu0
    %v132 = vadd.f32 %v76, %v131
    %v133 = vpop.f32.mrb[0].mxu0
    %v134 = vpop.f32.mrb[0].mxu0
    %135 = vdwg.mxu0
    %v136 = vld [vmem:[%s0] sm:$0xf]
    %v137 = vld [vmem:[%s0 + $0x4] sm:$0xf]
    %v138 = vld [vmem:[%s0 + $0x8] sm:$0xf]
    %v139 = vld [vmem:[%s0 + $0xc] sm:$0xf]
    %v140 = vld [vmem:[%s0 + $0x10] sm:$0xf]
    %v141 = vld [vmem:[%s0 + $0x14] sm:$0xf]
    %v142 = vld [vmem:[%s0 + $0x18] sm:$0xf]
    %v143 = vld [vmem:[%s0 + $0x1c] sm:$0xf]
    %v144 = vld [vmem:[%s4] sm:$0x77]
    %v145 = vld [vmem:[%s4 + $0x8] sm:$0x77]
    %v146 = vld [vmem:[%s4 + $0x10] sm:$0x77]
    %v147 = vld [vmem:[%s4 + $0x18] sm:$0x77]
    %v148 = vld [vmem:[%s5] sm:$0xff]
    %v150 = vlaneseq
    %v151 = vshrl.u32 %v150, 7
    %v152 = vsub.s32 0, %v151
    %v153 = vrot.slane %v148, %v152
    %v154 = vlaneseq
    %v155 = vshrl.u32 %v154, 7
    %v156 = vsub.s32 1, %v155
    %v157 = vrot.slane %v148, %v156
    %v158 = vlaneseq
    %v159 = vshrl.u32 %v158, 7
    %v160 = vsub.s32 2, %v159
    %v161 = vrot.slane %v148, %v160
    %v162 = vlaneseq
    %v163 = vshrl.u32 %v162, 7
    %v164 = vsub.s32 3, %v163
    %v165 = vrot.slane %v148, %v164
    %v166 = vlaneseq
    %v167 = vshrl.u32 %v166, 7
    %v168 = vsub.s32 4, %v167
    %v169 = vrot.slane %v148, %v168
    %v170 = vlaneseq
    %v171 = vshrl.u32 %v170, 7
    %v172 = vsub.s32 5, %v171
    %v173 = vrot.slane %v148, %v172
    %v174 = vlaneseq
    %v175 = vshrl.u32 %v174, 7
    %v176 = vsub.s32 6, %v175
    %v177 = vrot.slane %v148, %v176
    %v178 = vlaneseq
    %v179 = vshrl.u32 %v178, 7
    %v180 = vsub.s32 7, %v179
    %v181 = vrot.slane %v148, %v180
    %v198 = vunpack.c.l.b16 %v136
    %v199 = vunpack.c.l.b16 %v137
    %v200 = vunpack.c.l.b16 %v138
    %v201 = vunpack.c.l.b16 %v139
    %v202 = vunpack.c.l.b16 %v140
    %v203 = vunpack.c.l.b16 %v141
    %v204 = vunpack.c.l.b16 %v142
    %v205 = vunpack.c.l.b16 %v143
    %v206 = vpack.c.b16 %v199, %v198
    %v207 = vpack.c.b16 %v201, %v200
    %v208 = vpack.c.b16 %v203, %v202
    %v209 = vpack.c.b16 %v205, %v204
    %v214 = vunpack.c.l.b16 %v144
    %v215 = vunpack.c.h.b16 %v144
    %v216 = vunpack.c.l.b16 %v145
    %v217 = vunpack.c.h.b16 %v145
    %v218 = vunpack.c.l.b16 %v146
    %v219 = vunpack.c.h.b16 %v146
    %v220 = vunpack.c.l.b16 %v147
    %v221 = vunpack.c.h.b16 %v147
    %v222 = vpack.c.b16 %v214, %v214
    %v223 = vpack.c.b16 %v215, %v215
    %v224 = vpack.c.b16 %v216, %v216
    %v225 = vpack.c.b16 %v217, %v217
    %v226 = vpack.c.b16 %v218, %v218
    %v227 = vpack.c.b16 %v219, %v219
    %v228 = vpack.c.b16 %v220, %v220
    %v229 = vpack.c.b16 %v221, %v221
    %v231 = vsel %vm84, %v206, 0
    %v234 = vsel %vm84, %v207, 0
    %v237 = vsel %vm84, %v208, 0
    %v240 = vsel %vm84, %v209, 0
    %v243 = vsel %vm88, %v222, 0
    %v246 = vsel %vm88, %v223, 0
    %v249 = vsel %vm88, %v224, 0
    %v252 = vsel %vm88, %v225, 0
    %v255 = vsel %vm88, %v226, 0
    %v258 = vsel %vm88, %v227, 0
    %v261 = vsel %vm88, %v228, 0
    %v264 = vsel %vm88, %v229, 0
    %266 = vmatprep.subr.bf16.mxu0 %v246
    %267 = vmatpush1.bf16.msra.mxu0 %v243
    %268 = vmatprep.subr.bf16.mxu0 0
    %269 = vmatpush1.bf16.msra.mxu0 0
    %270 = vmatprep.subr.bf16.mxu0 0
    %271 = vmatpush1.bf16.msra.mxu0 0
    %272 = vmatprep.subr.bf16.mxu0 0
    %273 = vmatpush1.bf16.msra.mxu0 0
    %274 = vmatprep.subr.bf16.mxu0 0
    %275 = vmatpush1.bf16.msra.mxu0 0
    %276 = vmatprep.subr.bf16.mxu0 0
    %277 = vmatpush1.bf16.msra.mxu0 0
    %278 = vmatprep.subr.bf16.mxu0 0
    %279 = vmatpush1.bf16.msra.mxu0 0
    %280 = vmatprep.subr.bf16.mxu0 0
    %281 = vmatpush1.bf16.msra.mxu0 0
    %282 = vmatprep.subr.bf16.mxu0 0
    %283 = vmatpush1.bf16.msra.mxu0 0
    %284 = vmatprep.subr.bf16.mxu0 0
    %285 = vmatpush1.bf16.msra.mxu0 0
    %286 = vmatprep.subr.bf16.mxu0 0
    %287 = vmatpush1.bf16.msra.mxu0 0
    %288 = vmatprep.subr.bf16.mxu0 0
    %289 = vmatpush1.bf16.msra.mxu0 0
    %290 = vmatprep.subr.bf16.mxu0 0
    %291 = vmatpush1.bf16.msra.mxu0 0
    %292 = vmatprep.subr.bf16.mxu0 0
    %293 = vmatpush1.bf16.msra.mxu0 0
    %294 = vmatprep.subr.bf16.mxu0 0
    %295 = vmatpush1.bf16.msra.mxu0 0
    %296 = vmatprep.subr.bf16.mxu0 0
    %297 = vmatpush1.bf16.msra.mxu0 0
    %298 = vmatprep.mubr.bf16.mxu0 0
    %299 = vmatmul.mubr.bf16.gmra.mrb[0].mxu0 %v231
    %v300 = vpop.f32.mrb[0].mxu0
    %v301 = vadd.f32 %v153, %v300
    %v302 = vpop.f32.mrb[0].mxu0
    %v303 = vadd.f32 %v157, %v302
    %v304 = vpop.f32.mrb[0].mxu0
    %v305 = vadd.f32 %v153, %v304
    %v306 = vpop.f32.mrb[0].mxu0
    %v307 = vadd.f32 %v157, %v306
    %308 = vmatprep.mubr.bf16.mxu0 0
    %309 = vmatmul.mubr.bf16.gmra.mrb[0].mxu0 %v234
    %v310 = vpop.f32.mrb[0].mxu0
    %v311 = vadd.f32 %v153, %v310
    %v312 = vpop.f32.mrb[0].mxu0
    %v313 = vadd.f32 %v157, %v312
    %v314 = vpop.f32.mrb[0].mxu0
    %v315 = vadd.f32 %v153, %v314
    %v316 = vpop.f32.mrb[0].mxu0
    %v317 = vadd.f32 %v157, %v316
    %318 = vmatprep.mubr.bf16.mxu0 0
    %319 = vmatmul.mubr.bf16.gmra.mrb[0].mxu0 %v237
    %v320 = vpop.f32.mrb[0].mxu0
    %v321 = vadd.f32 %v153, %v320
    %v322 = vpop.f32.mrb[0].mxu0
    %v323 = vadd.f32 %v157, %v322
    %v324 = vpop.f32.mrb[0].mxu0
    %v325 = vadd.f32 %v153, %v324
    %v326 = vpop.f32.mrb[0].mxu0
    %v327 = vadd.f32 %v157, %v326
    %328 = vmatprep.mubr.bf16.mxu0 0
    %329 = vmatmul.mubr.bf16.gmra.mrb[0].mxu0 %v240
    %v330 = vpop.f32.mrb[0].mxu0
    %v331 = vadd.f32 %v153, %v330
    %v332 = vpop.f32.mrb[0].mxu0
    %v333 = vadd.f32 %v157, %v332
    %v334 = vpop.f32.mrb[0].mxu0
    %v335 = vadd.f32 %v153, %v334
    %v336 = vpop.f32.mrb[0].mxu0
    %v337 = vadd.f32 %v157, %v336
    %338 = vdwg.mxu0
    %339 = vmatprep.subr.bf16.mxu0 %v252
    %340 = vmatpush1.bf16.msra.mxu0 %v249
    %341 = vmatprep.subr.bf16.mxu0 0
    %342 = vmatpush1.bf16.msra.mxu0 0
    %343 = vmatprep.subr.bf16.mxu0 0
    %344 = vmatpush1.bf16.msra.mxu0 0
    %345 = vmatprep.subr.bf16.mxu0 0
    %346 = vmatpush1.bf16.msra.mxu0 0
    %347 = vmatprep.subr.bf16.mxu0 0
    %348 = vmatpush1.bf16.msra.mxu0 0
    %349 = vmatprep.subr.bf16.mxu0 0
    %350 = vmatpush1.bf16.msra.mxu0 0
    %351 = vmatprep.subr.bf16.mxu0 0
    %352 = vmatpush1.bf16.msra.mxu0 0
    %353 = vmatprep.subr.bf16.mxu0 0
    %354 = vmatpush1.bf16.msra.mxu0 0
    %355 = vmatprep.subr.bf16.mxu0 0
    %356 = vmatpush1.bf16.msra.mxu0 0
    %357 = vmatprep.subr.bf16.mxu0 0
    %358 = vmatpush1.bf16.msra.mxu0 0
    %359 = vmatprep.subr.bf16.mxu0 0
    %360 = vmatpush1.bf16.msra.mxu0 0
    %361 = vmatprep.subr.bf16.mxu0 0
    %362 = vmatpush1.bf16.msra.mxu0 0
    %363 = vmatprep.subr.bf16.mxu0 0
    %364 = vmatpush1.bf16.msra.mxu0 0
    %365 = vmatprep.subr.bf16.mxu0 0
    %366 = vmatpush1.bf16.msra.mxu0 0
    %367 = vmatprep.subr.bf16.mxu0 0
    %368 = vmatpush1.bf16.msra.mxu0 0
    %369 = vmatprep.subr.bf16.mxu0 0
    %370 = vmatpush1.bf16.msra.mxu0 0
    %371 = vmatprep.mubr.bf16.mxu0 0
    %372 = vmatmul.mubr.bf16.gmra.mrb[0].mxu0 %v231
    %v373 = vpop.f32.mrb[0].mxu0
    %v374 = vadd.f32 %v161, %v373
    %v375 = vpop.f32.mrb[0].mxu0
    %v376 = vadd.f32 %v165, %v375
    %v377 = vpop.f32.mrb[0].mxu0
    %v378 = vadd.f32 %v161, %v377
    %v379 = vpop.f32.mrb[0].mxu0
    %v380 = vadd.f32 %v165, %v379
    %381 = vmatprep.mubr.bf16.mxu0 0
    %382 = vmatmul.mubr.bf16.gmra.mrb[0].mxu0 %v234
    %v383 = vpop.f32.mrb[0].mxu0
    %v384 = vadd.f32 %v161, %v383
    %v385 = vpop.f32.mrb[0].mxu0
    %v386 = vadd.f32 %v165, %v385
    %v387 = vpop.f32.mrb[0].mxu0
    %v388 = vadd.f32 %v161, %v387
    %v389 = vpop.f32.mrb[0].mxu0
    %v390 = vadd.f32 %v165, %v389
    %391 = vmatprep.mubr.bf16.mxu0 0
    %392 = vmatmul.mubr.bf16.gmra.mrb[0].mxu0 %v237
    %v393 = vpop.f32.mrb[0].mxu0
    %v394 = vadd.f32 %v161, %v393
    %v395 = vpop.f32.mrb[0].mxu0
    %v396 = vadd.f32 %v165, %v395
    %v397 = vpop.f32.mrb[0].mxu0
    %v398 = vadd.f32 %v161, %v397
    %v399 = vpop.f32.mrb[0].mxu0
    %v400 = vadd.f32 %v165, %v399
    %401 = vmatprep.mubr.bf16.mxu0 0
    %402 = vmatmul.mubr.bf16.gmra.mrb[0].mxu0 %v240
    %v403 = vpop.f32.mrb[0].mxu0
    %v404 = vadd.f32 %v161, %v403
    %v405 = vpop.f32.mrb[0].mxu0
    %v406 = vadd.f32 %v165, %v405
    %v407 = vpop.f32.mrb[0].mxu0
    %v408 = vadd.f32 %v161, %v407
    %v409 = vpop.f32.mrb[0].mxu0
    %v410 = vadd.f32 %v165, %v409
    %411 = vdwg.mxu0
    %412 = vmatprep.subr.bf16.mxu0 %v258
    %413 = vmatpush1.bf16.msra.mxu0 %v255
    %414 = vmatprep.subr.bf16.mxu0 0
    %415 = vmatpush1.bf16.msra.mxu0 0
    %416 = vmatprep.subr.bf16.mxu0 0
    %417 = vmatpush1.bf16.msra.mxu0 0
    %418 = vmatprep.subr.bf16.mxu0 0
    %419 = vmatpush1.bf16.msra.mxu0 0
    %420 = vmatprep.subr.bf16.mxu0 0
    %421 = vmatpush1.bf16.msra.mxu0 0
    %422 = vmatprep.subr.bf16.mxu0 0
    %423 = vmatpush1.bf16.msra.mxu0 0
    %424 = vmatprep.subr.bf16.mxu0 0
    %425 = vmatpush1.bf16.msra.mxu0 0
    %426 = vmatprep.subr.bf16.mxu0 0
    %427 = vmatpush1.bf16.msra.mxu0 0
    %428 = vmatprep.subr.bf16.mxu0 0
    %429 = vmatpush1.bf16.msra.mxu0 0
    %430 = vmatprep.subr.bf16.mxu0 0
    %431 = vmatpush1.bf16.msra.mxu0 0
    %432 = vmatprep.subr.bf16.mxu0 0
    %433 = vmatpush1.bf16.msra.mxu0 0
    %434 = vmatprep.subr.bf16.mxu0 0
    %435 = vmatpush1.bf16.msra.mxu0 0
    %436 = vmatprep.subr.bf16.mxu0 0
    %437 = vmatpush1.bf16.msra.mxu0 0
    %438 = vmatprep.subr.bf16.mxu0 0
    %439 = vmatpush1.bf16.msra.mxu0 0
    %440 = vmatprep.subr.bf16.mxu0 0
    %441 = vmatpush1.bf16.msra.mxu0 0
    %442 = vmatprep.subr.bf16.mxu0 0
    %443 = vmatpush1.bf16.msra.mxu0 0
    %444 = vmatprep.mubr.bf16.mxu0 0
    %445 = vmatmul.mubr.bf16.gmra.mrb[0].mxu0 %v231
    %v446 = vpop.f32.mrb[0].mxu0
    %v447 = vpop.f32.mrb[0].mxu0
    %v448 = vpop.f32.mrb[0].mxu0
    %v449 = vpop.f32.mrb[0].mxu0
    %450 = vmatprep.mubr.bf16.mxu0 0
    %451 = vmatmul.mubr.bf16.gmra.mrb[0].mxu0 %v234
    %v452 = vpop.f32.mrb[0].mxu0
    %v453 = vpop.f32.mrb[0].mxu0
    %v454 = vpop.f32.mrb[0].mxu0
    %v455 = vpop.f32.mrb[0].mxu0
    %456 = vmatprep.mubr.bf16.mxu0 0
    %457 = vmatmul.mubr.bf16.gmra.mrb[0].mxu0 %v237
    %v458 = vpop.f32.mrb[0].mxu0
    %v459 = vpop.f32.mrb[0].mxu0
    %v460 = vpop.f32.mrb[0].mxu0
    %v461 = vpop.f32.mrb[0].mxu0
    %462 = vmatprep.mubr.bf16.mxu0 0
    %463 = vmatmul.mubr.bf16.gmra.mrb[0].mxu0 %v240
    %v464 = vpop.f32.mrb[0].mxu0
    %v465 = vpop.f32.mrb[0].mxu0
    %v466 = vpop.f32.mrb[0].mxu0
    %v467 = vadd.f32 %v169, %v466
    %v468 = vpop.f32.mrb[0].mxu0
    %v469 = vadd.f32 %v173, %v468
    %470 = vdwg.mxu0
    %471 = vmatprep.subr.bf16.mxu0 %v264
    %472 = vmatpush1.bf16.msra.mxu0 %v261
    %473 = vmatprep.subr.bf16.mxu0 0
    %474 = vmatpush1.bf16.msra.mxu0 0
    %475 = vmatprep.subr.bf16.mxu0 0
    %476 = vmatpush1.bf16.msra.mxu0 0
    %477 = vmatprep.subr.bf16.mxu0 0
    %478 = vmatpush1.bf16.msra.mxu0 0
    %479 = vmatprep.subr.bf16.mxu0 0
    %480 = vmatpush1.bf16.msra.mxu0 0
    %481 = vmatprep.subr.bf16.mxu0 0
    %482 = vmatpush1.bf16.msra.mxu0 0
    %483 = vmatprep.subr.bf16.mxu0 0
    %484 = vmatpush1.bf16.msra.mxu0 0
    %485 = vmatprep.subr.bf16.mxu0 0
    %486 = vmatpush1.bf16.msra.mxu0 0
    %487 = vmatprep.subr.bf16.mxu0 0
    %488 = vmatpush1.bf16.msra.mxu0 0
    %489 = vmatprep.subr.bf16.mxu0 0
    %490 = vmatpush1.bf16.msra.mxu0 0
    %491 = vmatprep.subr.bf16.mxu0 0
    %492 = vmatpush1.bf16.msra.mxu0 0
    %493 = vmatprep.subr.bf16.mxu0 0
    %494 = vmatpush1.bf16.msra.mxu0 0
    %495 = vmatprep.subr.bf16.mxu0 0
    %496 = vmatpush1.bf16.msra.mxu0 0
    %497 = vmatprep.subr.bf16.mxu0 0
    %498 = vmatpush1.bf16.msra.mxu0 0
    %499 = vmatprep.subr.bf16.mxu0 0
    %500 = vmatpush1.bf16.msra.mxu0 0
    %501 = vmatprep.subr.bf16.mxu0 0
    %502 = vmatpush1.bf16.msra.mxu0 0
    %503 = vmatprep.mubr.bf16.mxu0 0
    %504 = vmatmul.mubr.bf16.gmra.mrb[0].mxu0 %v231
    %v505 = vpop.f32.mrb[0].mxu0
    %v506 = vpop.f32.mrb[0].mxu0
    %v507 = vpop.f32.mrb[0].mxu0
    %v508 = vpop.f32.mrb[0].mxu0
    %509 = vmatprep.mubr.bf16.mxu0 0
    %510 = vmatmul.mubr.bf16.gmra.mrb[0].mxu0 %v234
    %v511 = vpop.f32.mrb[0].mxu0
    %v512 = vpop.f32.mrb[0].mxu0
    %v513 = vpop.f32.mrb[0].mxu0
    %v514 = vpop.f32.mrb[0].mxu0
    %515 = vmatprep.mubr.bf16.mxu0 0
    %516 = vmatmul.mubr.bf16.gmra.mrb[0].mxu0 %v237
    %v517 = vpop.f32.mrb[0].mxu0
    %v518 = vpop.f32.mrb[0].mxu0
    %v519 = vpop.f32.mrb[0].mxu0
    %v520 = vpop.f32.mrb[0].mxu0
    %521 = vmatprep.mubr.bf16.mxu0 0
    %522 = vmatmul.mubr.bf16.gmra.mrb[0].mxu0 %v240
    %v523 = vpop.f32.mrb[0].mxu0
    %v524 = vpop.f32.mrb[0].mxu0
    %v525 = vpop.f32.mrb[0].mxu0
    %v526 = vadd.f32 %v177, %v525
    %v527 = vpop.f32.mrb[0].mxu0
    %v528 = vadd.f32 %v181, %v527
    %529 = vdwg.mxu0
    %v530 = vld [vmem:[#allocation2] sm:$0xff]
    %v531 = vld [vmem:[#allocation2 + $0x8] sm:$0xff]
    %v532 = vld [vmem:[#allocation2 + $0x10] sm:$0xff]
    %v533 = vld [vmem:[#allocation2 + $0x18] sm:$0xff]
    %v534 = vld [vmem:[#allocation2 + $0x20] sm:$0xff]
    %v535 = vld [vmem:[#allocation2 + $0x28] sm:$0xff]
    %v536 = vld [vmem:[#allocation2 + $0x30] sm:$0xff]
    %v537 = vld [vmem:[#allocation2 + $0x38] sm:$0xff]
    %v538 = vld [vmem:[#allocation2 + $0x40] sm:$0xff]
    %v539 = vld [vmem:[#allocation2 + $0x48] sm:$0xff]
    %v540 = vld [vmem:[#allocation2 + $0x50] sm:$0xff]
    %v541 = vld [vmem:[#allocation2 + $0x58] sm:$0xff]
    %v542 = vld [vmem:[#allocation2 + $0x60] sm:$0xff]
    %v543 = vld [vmem:[#allocation2 + $0x68] sm:$0xff]
    %v544 = vld [vmem:[#allocation2 + $0x70] sm:$0xff]
    %v545 = vld [vmem:[#allocation2 + $0x78] sm:$0xff]
    %v546 = vld [vmem:[#allocation2 + $0x80] sm:$0xff]
    %v547 = vld [vmem:[#allocation2 + $0x88] sm:$0xff]
    %v548 = vld [vmem:[#allocation2 + $0x90] sm:$0xff]
    %v549 = vld [vmem:[#allocation2 + $0x98] sm:$0xff]
    %v550 = vld [vmem:[#allocation2 + $0xa0] sm:$0xff]
    %v551 = vld [vmem:[#allocation2 + $0xa8] sm:$0xff]
    %v552 = vld [vmem:[#allocation2 + $0xb0] sm:$0xff]
    %v553 = vld [vmem:[#allocation2 + $0xb8] sm:$0xff]
    %v554 = vld [vmem:[#allocation2 + $0xc0] sm:$0xff]
    %v555 = vld [vmem:[#allocation2 + $0xc8] sm:$0xff]
    %v556 = vld [vmem:[#allocation2 + $0xd0] sm:$0xff]
    %v557 = vld [vmem:[#allocation2 + $0xd8] sm:$0xff]
    %v558 = vld [vmem:[#allocation2 + $0xe0] sm:$0xff]
    %v559 = vld [vmem:[#allocation2 + $0xe8] sm:$0xff]
    %v560 = vld [vmem:[#allocation2 + $0xf0] sm:$0xff]
    %v561 = vld [vmem:[#allocation2 + $0xf8] sm:$0xff]
    %v562 = vld [vmem:[#allocation5] sm:$0xff]
    %v563 = vld [vmem:[#allocation5 + $0x8] sm:$0xff]
    %v564 = vld [vmem:[#allocation5 + $0x10] sm:$0xff]
    %v565 = vld [vmem:[#allocation5 + $0x18] sm:$0xff]
    %v566 = vld [vmem:[#allocation5 + $0x20] sm:$0xff]
    %v567 = vld [vmem:[#allocation5 + $0x28] sm:$0xff]
    %v568 = vld [vmem:[#allocation5 + $0x30] sm:$0xff]
    %v569 = vld [vmem:[#allocation5 + $0x38] sm:$0xff]
    %v570 = vld [vmem:[#allocation5 + $0x40] sm:$0xff]
    %v571 = vld [vmem:[#allocation5 + $0x48] sm:$0xff]
    %v572 = vld [vmem:[#allocation5 + $0x50] sm:$0xff]
    %v573 = vld [vmem:[#allocation5 + $0x58] sm:$0xff]
    %v574 = vld [vmem:[#allocation5 + $0x60] sm:$0xff]
    %v575 = vld [vmem:[#allocation5 + $0x68] sm:$0xff]
    %v576 = vld [vmem:[#allocation5 + $0x70] sm:$0xff]
    %v577 = vld [vmem:[#allocation5 + $0x78] sm:$0xff]
    %v578 = vld [vmem:[#allocation5 + $0x80] sm:$0xff]
    %v579 = vld [vmem:[#allocation5 + $0x88] sm:$0xff]
    %v580 = vld [vmem:[#allocation5 + $0x90] sm:$0xff]
    %v581 = vld [vmem:[#allocation5 + $0x98] sm:$0xff]
    %v582 = vld [vmem:[#allocation5 + $0xa0] sm:$0xff]
    %v583 = vld [vmem:[#allocation5 + $0xa8] sm:$0xff]
    %v584 = vld [vmem:[#allocation5 + $0xb0] sm:$0xff]
    %v585 = vld [vmem:[#allocation5 + $0xb8] sm:$0xff]
    %v586 = vld [vmem:[#allocation5 + $0xc0] sm:$0xff]
    %v587 = vld [vmem:[#allocation5 + $0xc8] sm:$0xff]
    %v588 = vld [vmem:[#allocation5 + $0xd0] sm:$0xff]
    %v589 = vld [vmem:[#allocation5 + $0xd8] sm:$0xff]
    %v590 = vld [vmem:[#allocation5 + $0xe0] sm:$0xff]
    %v591 = vld [vmem:[#allocation5 + $0xe8] sm:$0xff]
    %v592 = vld [vmem:[#allocation5 + $0xf0] sm:$0xff]
    %v593 = vld [vmem:[#allocation5 + $0xf8] sm:$0xff]
    %v594 = vpack.c.bf16 %v130, %v130
    %v627 = vunpack.c.l.b16 %v562
    %v628 = vunpack.c.h.b16 %v562
    %v629 = vunpack.c.l.b16 %v563
    %v630 = vunpack.c.h.b16 %v563
    %v631 = vunpack.c.l.b16 %v564
    %v632 = vunpack.c.h.b16 %v564
    %v633 = vunpack.c.l.b16 %v565
    %v634 = vunpack.c.h.b16 %v565
    %v635 = vunpack.c.l.b16 %v566
    %v636 = vunpack.c.h.b16 %v566
    %v637 = vunpack.c.l.b16 %v567
    %v638 = vunpack.c.h.b16 %v567
    %v639 = vunpack.c.l.b16 %v568
    %v640 = vunpack.c.h.b16 %v568
    %v641 = vunpack.c.l.b16 %v569
    %v642 = vunpack.c.h.b16 %v569
    %v643 = vunpack.c.l.b16 %v570
    %v644 = vunpack.c.h.b16 %v570
    %v645 = vunpack.c.l.b16 %v571
    %v646 = vunpack.c.h.b16 %v571
    %v647 = vunpack.c.l.b16 %v572
    %v648 = vunpack.c.h.b16 %v572
    %v649 = vunpack.c.l.b16 %v573
    %v650 = vunpack.c.h.b16 %v573
    %v651 = vunpack.c.l.b16 %v574
    %v652 = vunpack.c.h.b16 %v574
    %v653 = vunpack.c.l.b16 %v575
    %v654 = vunpack.c.h.b16 %v575
    %v655 = vunpack.c.l.b16 %v576
    %v656 = vunpack.c.h.b16 %v576
    %v657 = vunpack.c.l.b16 %v577
    %v658 = vunpack.c.h.b16 %v577
    %v659 = vunpack.c.l.b16 %v578
    %v660 = vunpack.c.h.b16 %v578
    %v661 = vunpack.c.l.b16 %v579
    %v662 = vunpack.c.h.b16 %v579
    %v663 = vunpack.c.l.b16 %v580
    %v664 = vunpack.c.h.b16 %v580
    %v665 = vunpack.c.l.b16 %v581
    %v666 = vunpack.c.h.b16 %v581
    %v667 = vunpack.c.l.b16 %v582
    %v668 = vunpack.c.h.b16 %v582
    %v669 = vunpack.c.l.b16 %v583
    %v670 = vunpack.c.h.b16 %v583
    %v671 = vunpack.c.l.b16 %v584
    %v672 = vunpack.c.h.b16 %v584
    %v673 = vunpack.c.l.b16 %v585
    %v674 = vunpack.c.h.b16 %v585
    %v675 = vunpack.c.l.b16 %v586
    %v676 = vunpack.c.h.b16 %v586
    %v677 = vunpack.c.l.b16 %v587
    %v678 = vunpack.c.h.b16 %v587
    %v679 = vunpack.c.l.b16 %v588
    %v680 = vunpack.c.h.b16 %v588
    %v681 = vunpack.c.l.b16 %v589
    %v682 = vunpack.c.h.b16 %v589
    %v683 = vunpack.c.l.b16 %v590
    %v684 = vunpack.c.h.b16 %v590
    %v685 = vunpack.c.l.b16 %v591
    %v686 = vunpack.c.h.b16 %v591
    %v687 = vunpack.c.l.b16 %v592
    %v688 = vunpack.c.h.b16 %v592
    %v689 = vunpack.c.l.b16 %v593
    %v690 = vunpack.c.h.b16 %v593
    %v691 = vpack.c.b16 %v631, %v627
    %v692 = vpack.c.b16 %v632, %v628
    %v693 = vpack.c.b16 %v633, %v629
    %v694 = vpack.c.b16 %v634, %v630
    %v695 = vpack.c.b16 %v639, %v635
    %v696 = vpack.c.b16 %v640, %v636
    %v697 = vpack.c.b16 %v641, %v637
    %v698 = vpack.c.b16 %v642, %v638
    %v699 = vpack.c.b16 %v647, %v643
    %v700 = vpack.c.b16 %v648, %v644
    %v701 = vpack.c.b16 %v649, %v645
    %v702 = vpack.c.b16 %v650, %v646
    %v703 = vpack.c.b16 %v655, %v651
    %v704 = vpack.c.b16 %v656, %v652
    %v705 = vpack.c.b16 %v657, %v653
    %v706 = vpack.c.b16 %v658, %v654
    %v707 = vpack.c.b16 %v663, %v659
    %v708 = vpack.c.b16 %v664, %v660
    %v709 = vpack.c.b16 %v665, %v661
    %v710 = vpack.c.b16 %v666, %v662
    %v711 = vpack.c.b16 %v671, %v667
    %v712 = vpack.c.b16 %v672, %v668
    %v713 = vpack.c.b16 %v673, %v669
    %v714 = vpack.c.b16 %v674, %v670
    %v715 = vpack.c.b16 %v679, %v675
    %v716 = vpack.c.b16 %v680, %v676
    %v717 = vpack.c.b16 %v681, %v677
    %v718 = vpack.c.b16 %v682, %v678
    %v719 = vpack.c.b16 %v687, %v683
    %v720 = vpack.c.b16 %v688, %v684
    %v721 = vpack.c.b16 %v689, %v685
    %v722 = vpack.c.b16 %v690, %v686
    %755 = vmatprep.subr.bf16.mxu0 %v692
    %756 = vmatpush1.bf16.msra.mxu0 %v691
    %757 = vmatprep.subr.bf16.mxu0 %v696
    %758 = vmatpush1.bf16.msra.mxu0 %v695
    %759 = vmatprep.subr.bf16.mxu0 %v700
    %760 = vmatpush1.bf16.msra.mxu0 %v699
    %761 = vmatprep.subr.bf16.mxu0 %v704
    %762 = vmatpush1.bf16.msra.mxu0 %v703
    %763 = vmatprep.subr.bf16.mxu0 %v708
    %764 = vmatpush1.bf16.msra.mxu0 %v707
    %765 = vmatprep.subr.bf16.mxu0 %v712
    %766 = vmatpush1.bf16.msra.mxu0 %v711
    %767 = vmatprep.subr.bf16.mxu0 %v716
    %768 = vmatpush1.bf16.msra.mxu0 %v715
    %769 = vmatprep.subr.bf16.mxu0 %v720
    %770 = vmatpush1.bf16.msra.mxu0 %v719
    %771 = vmatprep.subr.bf16.mxu0 0
    %772 = vmatpush1.bf16.msra.mxu0 0
    %773 = vmatprep.subr.bf16.mxu0 0
    %774 = vmatpush1.bf16.msra.mxu0 0
    %775 = vmatprep.subr.bf16.mxu0 0
    %776 = vmatpush1.bf16.msra.mxu0 0
    %777 = vmatprep.subr.bf16.mxu0 0
    %778 = vmatpush1.bf16.msra.mxu0 0
    %779 = vmatprep.subr.bf16.mxu0 0
    %780 = vmatpush1.bf16.msra.mxu0 0
    %781 = vmatprep.subr.bf16.mxu0 0
    %782 = vmatpush1.bf16.msra.mxu0 0
    %783 = vmatprep.subr.bf16.mxu0 0
    %784 = vmatpush1.bf16.msra.mxu0 0
    %785 = vmatprep.subr.bf16.mxu0 0
    %786 = vmatpush1.bf16.msra.mxu0 0
    %787 = vmatprep.mubr.bf16.mxu0 0
    %788 = vmatmul.mubr.bf16.gmra.mrb[0].mxu0 %v594
    %v789 = vpop.f32.mrb[0].mxu0
    %v790 = vadd.f32 0.0, %v789
    %v791 = vpop.f32.mrb[0].mxu0
    %v792 = vadd.f32 0.0, %v791
    %v793 = vpop.f32.mrb[0].mxu0
    %v794 = vpop.f32.mrb[0].mxu0
    %795 = vdwg.mxu0
    %796 = vmatprep.subr.bf16.mxu0 %v694
    %797 = vmatpush1.bf16.msra.mxu0 %v693
    %798 = vmatprep.subr.bf16.mxu0 %v698
    %799 = vmatpush1.bf16.msra.mxu0 %v697
    %800 = vmatprep.subr.bf16.mxu0 %v702
    %801 = vmatpush1.bf16.msra.mxu0 %v701
    %802 = vmatprep.subr.bf16.mxu0 %v706
    %803 = vmatpush1.bf16.msra.mxu0 %v705
    %804 = vmatprep.subr.bf16.mxu0 %v710
    %805 = vmatpush1.bf16.msra.mxu0 %v709
    %806 = vmatprep.subr.bf16.mxu0 %v714
    %807 = vmatpush1.bf16.msra.mxu0 %v713
    %808 = vmatprep.subr.bf16.mxu0 %v718
    %809 = vmatpush1.bf16.msra.mxu0 %v717
    %810 = vmatprep.subr.bf16.mxu0 %v722
    %811 = vmatpush1.bf16.msra.mxu0 %v721
    %812 = vmatprep.subr.bf16.mxu0 0
    %813 = vmatpush1.bf16.msra.mxu0 0
    %814 = vmatprep.subr.bf16.mxu0 0
    %815 = vmatpush1.bf16.msra.mxu0 0
    %816 = vmatprep.subr.bf16.mxu0 0
    %817 = vmatpush1.bf16.msra.mxu0 0
    %818 = vmatprep.subr.bf16.mxu0 0
    %819 = vmatpush1.bf16.msra.mxu0 0
    %820 = vmatprep.subr.bf16.mxu0 0
    %821 = vmatpush1.bf16.msra.mxu0 0
    %822 = vmatprep.subr.bf16.mxu0 0
    %823 = vmatpush1.bf16.msra.mxu0 0
    %824 = vmatprep.subr.bf16.mxu0 0
    %825 = vmatpush1.bf16.msra.mxu0 0
    %826 = vmatprep.subr.bf16.mxu0 0
    %827 = vmatpush1.bf16.msra.mxu0 0
    %828 = vmatprep.mubr.bf16.mxu0 0
    %829 = vmatmul.mubr.bf16.gmra.mrb[0].mxu0 %v594
    %v830 = vpop.f32.mrb[0].mxu0
    %v831 = vadd.f32 0.0, %v830
    %v832 = vpop.f32.mrb[0].mxu0
    %v833 = vadd.f32 0.0, %v832
    %v834 = vpop.f32.mrb[0].mxu0
    %v835 = vpop.f32.mrb[0].mxu0
    %836 = vdwg.mxu0
    %v837 = vadd.f32 %v467, %v790
    %v838 = vadd.f32 %v469, %v792
    %v839 = vadd.f32 %v526, %v831
    %v840 = vadd.f32 %v528, %v833
    %v841 = vxor.u32 %v837, 2147483648
    %v842 = vmul.f32 %v841, 1.442695
    %v843 = vpow.pop %v842
    %v844 = vadd.f32 %v843, 1.0
    %v845 = vrcp.pop %v844
    %v846 = vmul.f32 1.0, %v845
    %v847 = vxor.u32 %v838, 2147483648
    %v848 = vmul.f32 %v847, 1.442695
    %v849 = vpow.pop %v848
    %v850 = vadd.f32 %v849, 1.0
    %v851 = vrcp.pop %v850
    %v852 = vmul.f32 1.0, %v851
    %v853 = vtanh.pop %v839
    %v854 = vxor.u32 %v840, 2147483648
    %v855 = vmul.f32 %v854, 1.442695
    %v856 = vpow.pop %v855
    %v857 = vadd.f32 %v856, 1.0
    %v858 = vrcp.pop %v857
    %v859 = vmul.f32 1.0, %v858
    %v860 = vmul.f32 %v852, %v132
    %v861 = vmul.f32 %v846, %v853
    %v862 = vadd.f32 %v860, %v861
    %v863 = vtanh.pop %v862
    %v864 = vmul.f32 %v859, %v863
    %v897 = vunpack.c.l.b16 %v530
    %v898 = vunpack.c.h.b16 %v530
    %v899 = vunpack.c.l.b16 %v531
    %v900 = vunpack.c.h.b16 %v531
    %v901 = vunpack.c.l.b16 %v532
    %v902 = vunpack.c.h.b16 %v532
    %v903 = vunpack.c.l.b16 %v533
    %v904 = vunpack.c.h.b16 %v533
    %v905 = vunpack.c.l.b16 %v534
    %v906 = vunpack.c.h.b16 %v534
    %v907 = vunpack.c.l.b16 %v535
    %v908 = vunpack.c.h.b16 %v535
    %v909 = vunpack.c.l.b16 %v536
    %v910 = vunpack.c.h.b16 %v536
    %v911 = vunpack.c.l.b16 %v537
    %v912 = vunpack.c.h.b16 %v537
    %v913 = vunpack.c.l.b16 %v538
    %v914 = vunpack.c.h.b16 %v538
    %v915 = vunpack.c.l.b16 %v539
    %v916 = vunpack.c.h.b16 %v539
    %v917 = vunpack.c.l.b16 %v540
    %v918 = vunpack.c.h.b16 %v540
    %v919 = vunpack.c.l.b16 %v541
    %v920 = vunpack.c.h.b16 %v541
    %v921 = vunpack.c.l.b16 %v542
    %v922 = vunpack.c.h.b16 %v542
    %v923 = vunpack.c.l.b16 %v543
    %v924 = vunpack.c.h.b16 %v543
    %v925 = vunpack.c.l.b16 %v544
    %v926 = vunpack.c.h.b16 %v544
    %v927 = vunpack.c.l.b16 %v545
    %v928 = vunpack.c.h.b16 %v545
    %v929 = vunpack.c.l.b16 %v546
    %v930 = vunpack.c.h.b16 %v546
    %v931 = vunpack.c.l.b16 %v547
    %v932 = vunpack.c.h.b16 %v547
    %v933 = vunpack.c.l.b16 %v548
    %v934 = vunpack.c.h.b16 %v548
    %v935 = vunpack.c.l.b16 %v549
    %v936 = vunpack.c.h.b16 %v549
    %v937 = vunpack.c.l.b16 %v550
    %v938 = vunpack.c.h.b16 %v550
    %v939 = vunpack.c.l.b16 %v551
    %v940 = vunpack.c.h.b16 %v551
    %v941 = vunpack.c.l.b16 %v552
    %v942 = vunpack.c.h.b16 %v552
    %v943 = vunpack.c.l.b16 %v553
    %v944 = vunpack.c.h.b16 %v553
    %v945 = vunpack.c.l.b16 %v554
    %v946 = vunpack.c.h.b16 %v554
    %v947 = vunpack.c.l.b16 %v555
    %v948 = vunpack.c.h.b16 %v555
    %v949 = vunpack.c.l.b16 %v556
    %v950 = vunpack.c.h.b16 %v556
    %v951 = vunpack.c.l.b16 %v557
    %v952 = vunpack.c.h.b16 %v557
    %v953 = vunpack.c.l.b16 %v558
    %v954 = vunpack.c.h.b16 %v558
    %v955 = vunpack.c.l.b16 %v559
    %v956 = vunpack.c.h.b16 %v559
    %v957 = vunpack.c.l.b16 %v560
    %v958 = vunpack.c.h.b16 %v560
    %v959 = vunpack.c.l.b16 %v561
    %v960 = vunpack.c.h.b16 %v561
    %v961 = vpack.c.b16 %v901, %v897
    %v962 = vpack.c.b16 %v902, %v898
    %v963 = vpack.c.b16 %v903, %v899
    %v964 = vpack.c.b16 %v904, %v900
    %v965 = vpack.c.b16 %v909, %v905
    %v966 = vpack.c.b16 %v910, %v906
    %v967 = vpack.c.b16 %v911, %v907
    %v968 = vpack.c.b16 %v912, %v908
    %v969 = vpack.c.b16 %v917, %v913
    %v970 = vpack.c.b16 %v918, %v914
    %v971 = vpack.c.b16 %v919, %v915
    %v972 = vpack.c.b16 %v920, %v916
    %v973 = vpack.c.b16 %v925, %v921
    %v974 = vpack.c.b16 %v926, %v922
    %v975 = vpack.c.b16 %v927, %v923
    %v976 = vpack.c.b16 %v928, %v924
    %v977 = vpack.c.b16 %v933, %v929
    %v978 = vpack.c.b16 %v934, %v930
    %v979 = vpack.c.b16 %v935, %v931
    %v980 = vpack.c.b16 %v936, %v932
    %v981 = vpack.c.b16 %v941, %v937
    %v982 = vpack.c.b16 %v942, %v938
    %v983 = vpack.c.b16 %v943, %v939
    %v984 = vpack.c.b16 %v944, %v940
    %v985 = vpack.c.b16 %v949, %v945
    %v986 = vpack.c.b16 %v950, %v946
    %v987 = vpack.c.b16 %v951, %v947
    %v988 = vpack.c.b16 %v952, %v948
    %v989 = vpack.c.b16 %v957, %v953
    %v990 = vpack.c.b16 %v958, %v954
    %v991 = vpack.c.b16 %v959, %v955
    %v992 = vpack.c.b16 %v960, %v956
    %1025 = vmatprep.subr.bf16.mxu0 %v962
    %1026 = vmatpush1.bf16.msra.mxu0 %v961
    %1027 = vmatprep.subr.bf16.mxu0 %v966
    %1028 = vmatpush1.bf16.msra.mxu0 %v965
    %1029 = vmatprep.subr.bf16.mxu0 %v970
    %1030 = vmatpush1.bf16.msra.mxu0 %v969
    %1031 = vmatprep.subr.bf16.mxu0 %v974
    %1032 = vmatpush1.bf16.msra.mxu0 %v973
    %1033 = vmatprep.subr.bf16.mxu0 %v978
    %1034 = vmatpush1.bf16.msra.mxu0 %v977
    %1035 = vmatprep.subr.bf16.mxu0 %v982
    %1036 = vmatpush1.bf16.msra.mxu0 %v981
    %1037 = vmatprep.subr.bf16.mxu0 %v986
    %1038 = vmatpush1.bf16.msra.mxu0 %v985
    %1039 = vmatprep.subr.bf16.mxu0 %v990
    %1040 = vmatpush1.bf16.msra.mxu0 %v989
    %1041 = vmatprep.subr.bf16.mxu0 0
    %1042 = vmatpush1.bf16.msra.mxu0 0
    %1043 = vmatprep.subr.bf16.mxu0 0
    %1044 = vmatpush1.bf16.msra.mxu0 0
    %1045 = vmatprep.subr.bf16.mxu0 0
    %1046 = vmatpush1.bf16.msra.mxu0 0
    %1047 = vmatprep.subr.bf16.mxu0 0
    %1048 = vmatpush1.bf16.msra.mxu0 0
    %1049 = vmatprep.subr.bf16.mxu0 0
    %1050 = vmatpush1.bf16.msra.mxu0 0
    %1051 = vmatprep.subr.bf16.mxu0 0
    %1052 = vmatpush1.bf16.msra.mxu0 0
    %1053 = vmatprep.subr.bf16.mxu0 0
    %1054 = vmatpush1.bf16.msra.mxu0 0
    %1055 = vmatprep.subr.bf16.mxu0 0
    %1056 = vmatpush1.bf16.msra.mxu0 0
    %1057 = vmatprep.mubr.bf16.mxu0 0
    %1058 = vmatmul.mubr.bf16.gmra.mrb[0].mxu0 %v594
    %v1059 = vpop.f32.mrb[0].mxu0
    %v1060 = vadd.f32 0.0, %v1059
    %v1061 = vpop.f32.mrb[0].mxu0
    %v1062 = vadd.f32 0.0, %v1061
    %v1063 = vpop.f32.mrb[0].mxu0
    %v1064 = vpop.f32.mrb[0].mxu0
    %1065 = vdwg.mxu0
    %1066 = vmatprep.subr.bf16.mxu0 %v964
    %1067 = vmatpush1.bf16.msra.mxu0 %v963
    %1068 = vmatprep.subr.bf16.mxu0 %v968
    %1069 = vmatpush1.bf16.msra.mxu0 %v967
    %1070 = vmatprep.subr.bf16.mxu0 %v972
    %1071 = vmatpush1.bf16.msra.mxu0 %v971
    %1072 = vmatprep.subr.bf16.mxu0 %v976
    %1073 = vmatpush1.bf16.msra.mxu0 %v975
    %1074 = vmatprep.subr.bf16.mxu0 %v980
    %1075 = vmatpush1.bf16.msra.mxu0 %v979
    %1076 = vmatprep.subr.bf16.mxu0 %v984
    %1077 = vmatpush1.bf16.msra.mxu0 %v983
    %1078 = vmatprep.subr.bf16.mxu0 %v988
    %1079 = vmatpush1.bf16.msra.mxu0 %v987
    %1080 = vmatprep.subr.bf16.mxu0 %v992
    %1081 = vmatpush1.bf16.msra.mxu0 %v991
    %1082 = vmatprep.subr.bf16.mxu0 0
    %1083 = vmatpush1.bf16.msra.mxu0 0
    %1084 = vmatprep.subr.bf16.mxu0 0
    %1085 = vmatpush1.bf16.msra.mxu0 0
    %1086 = vmatprep.subr.bf16.mxu0 0
    %1087 = vmatpush1.bf16.msra.mxu0 0
    %1088 = vmatprep.subr.bf16.mxu0 0
    %1089 = vmatpush1.bf16.msra.mxu0 0
    %1090 = vmatprep.subr.bf16.mxu0 0
    %1091 = vmatpush1.bf16.msra.mxu0 0
    %1092 = vmatprep.subr.bf16.mxu0 0
    %1093 = vmatpush1.bf16.msra.mxu0 0
    %1094 = vmatprep.subr.bf16.mxu0 0
    %1095 = vmatpush1.bf16.msra.mxu0 0
    %1096 = vmatprep.subr.bf16.mxu0 0
    %1097 = vmatpush1.bf16.msra.mxu0 0
    %1098 = vmatprep.mubr.bf16.mxu0 0
    %1099 = vmatmul.mubr.bf16.gmra.mrb[0].mxu0 %v594
    %v1100 = vpop.f32.mrb[0].mxu0
    %v1101 = vadd.f32 0.0, %v1100
    %v1102 = vpop.f32.mrb[0].mxu0
    %v1103 = vadd.f32 0.0, %v1102
    %v1104 = vpop.f32.mrb[0].mxu0
    %v1105 = vpop.f32.mrb[0].mxu0
    %1106 = vdwg.mxu0
    %v1107 = vadd.f32 %v301, %v1060
    %v1108 = vadd.f32 %v303, %v1062
    %v1109 = vadd.f32 %v374, %v1101
    %v1110 = vadd.f32 %v376, %v1103
    %v1111 = vxor.u32 %v1107, 2147483648
    %v1112 = vmul.f32 %v1111, 1.442695
    %v1113 = vpow.pop %v1112
    %v1114 = vadd.f32 %v1113, 1.0
    %v1115 = vrcp.pop %v1114
    %v1116 = vmul.f32 1.0, %v1115
    %v1117 = vxor.u32 %v1108, 2147483648
    %v1118 = vmul.f32 %v1117, 1.442695
    %v1119 = vpow.pop %v1118
    %v1120 = vadd.f32 %v1119, 1.0
    %v1121 = vrcp.pop %v1120
    %v1122 = vmul.f32 1.0, %v1121
    %v1123 = vtanh.pop %v1109
    %v1124 = vxor.u32 %v1110, 2147483648
    %v1125 = vmul.f32 %v1124, 1.442695
    %v1126 = vpow.pop %v1125
    %v1127 = vadd.f32 %v1126, 1.0
    %v1128 = vrcp.pop %v1127
    %v1129 = vmul.f32 1.0, %v1128
    %v1130 = vmul.f32 %v1122, %v132
    %v1131 = vmul.f32 %v1116, %v1123
    %v1132 = vadd.f32 %v1130, %v1131
    %v1133 = vtanh.pop %v1132
    %v1134 = vmul.f32 %v1129, %v1133
    %v1135 = vpack.c.bf16 %v1134, %v1134
    %1136 = vmatprep.subr.bf16.mxu0 %v962
    %1137 = vmatpush1.bf16.msra.mxu0 %v961
    %1138 = vmatprep.subr.bf16.mxu0 %v966
    %1139 = vmatpush1.bf16.msra.mxu0 %v965
    %1140 = vmatprep.subr.bf16.mxu0 %v970
    %1141 = vmatpush1.bf16.msra.mxu0 %v969
    %1142 = vmatprep.subr.bf16.mxu0 %v974
    %1143 = vmatpush1.bf16.msra.mxu0 %v973
    %1144 = vmatprep.subr.bf16.mxu0 %v978
    %1145 = vmatpush1.bf16.msra.mxu0 %v977
    %1146 = vmatprep.subr.bf16.mxu0 %v982
    %1147 = vmatpush1.bf16.msra.mxu0 %v981
    %1148 = vmatprep.subr.bf16.mxu0 %v986
    %1149 = vmatpush1.bf16.msra.mxu0 %v985
    %1150 = vmatprep.subr.bf16.mxu0 %v990
    %1151 = vmatpush1.bf16.msra.mxu0 %v989
    %1152 = vmatprep.subr.bf16.mxu0 0
    %1153 = vmatpush1.bf16.msra.mxu0 0
    %1154 = vmatprep.subr.bf16.mxu0 0
    %1155 = vmatpush1.bf16.msra.mxu0 0
    %1156 = vmatprep.subr.bf16.mxu0 0
    %1157 = vmatpush1.bf16.msra.mxu0 0
    %1158 = vmatprep.subr.bf16.mxu0 0
    %1159 = vmatpush1.bf16.msra.mxu0 0
    %1160 = vmatprep.subr.bf16.mxu0 0
    %1161 = vmatpush1.bf16.msra.mxu0 0
    %1162 = vmatprep.subr.bf16.mxu0 0
    %1163 = vmatpush1.bf16.msra.mxu0 0
    %1164 = vmatprep.subr.bf16.mxu0 0
    %1165 = vmatpush1.bf16.msra.mxu0 0
    %1166 = vmatprep.subr.bf16.mxu0 0
    %1167 = vmatpush1.bf16.msra.mxu0 0
    %1168 = vmatprep.mubr.bf16.mxu0 0
    %1169 = vmatmul.mubr.bf16.gmra.mrb[0].mxu0 %v1135
    %v1170 = vpop.f32.mrb[0].mxu0
    %v1171 = vadd.f32 0.0, %v1170
    %v1172 = vpop.f32.mrb[0].mxu0
    %v1173 = vadd.f32 0.0, %v1172
    %v1174 = vpop.f32.mrb[0].mxu0
    %v1175 = vpop.f32.mrb[0].mxu0
    %1176 = vdwg.mxu0
    %1177 = vmatprep.subr.bf16.mxu0 %v964
    %1178 = vmatpush1.bf16.msra.mxu0 %v963
    %1179 = vmatprep.subr.bf16.mxu0 %v968
    %1180 = vmatpush1.bf16.msra.mxu0 %v967
    %1181 = vmatprep.subr.bf16.mxu0 %v972
    %1182 = vmatpush1.bf16.msra.mxu0 %v971
    %1183 = vmatprep.subr.bf16.mxu0 %v976
    %1184 = vmatpush1.bf16.msra.mxu0 %v975
    %1185 = vmatprep.subr.bf16.mxu0 %v980
    %1186 = vmatpush1.bf16.msra.mxu0 %v979
    %1187 = vmatprep.subr.bf16.mxu0 %v984
    %1188 = vmatpush1.bf16.msra.mxu0 %v983
    %1189 = vmatprep.subr.bf16.mxu0 %v988
    %1190 = vmatpush1.bf16.msra.mxu0 %v987
    %1191 = vmatprep.subr.bf16.mxu0 %v992
    %1192 = vmatpush1.bf16.msra.mxu0 %v991
    %1193 = vmatprep.subr.bf16.mxu0 0
    %1194 = vmatpush1.bf16.msra.mxu0 0
    %1195 = vmatprep.subr.bf16.mxu0 0
    %1196 = vmatpush1.bf16.msra.mxu0 0
    %1197 = vmatprep.subr.bf16.mxu0 0
    %1198 = vmatpush1.bf16.msra.mxu0 0
    %1199 = vmatprep.subr.bf16.mxu0 0
    %1200 = vmatpush1.bf16.msra.mxu0 0
    %1201 = vmatprep.subr.bf16.mxu0 0
    %1202 = vmatpush1.bf16.msra.mxu0 0
    %1203 = vmatprep.subr.bf16.mxu0 0
    %1204 = vmatpush1.bf16.msra.mxu0 0
    %1205 = vmatprep.subr.bf16.mxu0 0
    %1206 = vmatpush1.bf16.msra.mxu0 0
    %1207 = vmatprep.subr.bf16.mxu0 0
    %1208 = vmatpush1.bf16.msra.mxu0 0
    %1209 = vmatprep.mubr.bf16.mxu0 0
    %1210 = vmatmul.mubr.bf16.gmra.mrb[0].mxu0 %v1135
    %v1211 = vpop.f32.mrb[0].mxu0
    %v1212 = vadd.f32 0.0, %v1211
    %v1213 = vpop.f32.mrb[0].mxu0
    %v1214 = vadd.f32 0.0, %v1213
    %v1215 = vpop.f32.mrb[0].mxu0
    %v1216 = vpop.f32.mrb[0].mxu0
    %1217 = vdwg.mxu0
    %v1218 = vadd.f32 %v305, %v1171
    %v1219 = vadd.f32 %v307, %v1173
    %v1220 = vadd.f32 %v378, %v1212
    %v1221 = vadd.f32 %v380, %v1214
    %v1222 = vxor.u32 %v1218, 2147483648
    %v1223 = vmul.f32 %v1222, 1.442695
    %v1224 = vpow.pop %v1223
    %v1225 = vadd.f32 %v1224, 1.0
    %v1226 = vrcp.pop %v1225
    %v1227 = vmul.f32 1.0, %v1226
    %v1228 = vxor.u32 %v1219, 2147483648
    %v1229 = vmul.f32 %v1228, 1.442695
    %v1230 = vpow.pop %v1229
    %v1231 = vadd.f32 %v1230, 1.0
    %v1232 = vrcp.pop %v1231
    %v1233 = vmul.f32 1.0, %v1232
    %v1234 = vtanh.pop %v1220
    %v1235 = vxor.u32 %v1221, 2147483648
    %v1236 = vmul.f32 %v1235, 1.442695
    %v1237 = vpow.pop %v1236
    %v1238 = vadd.f32 %v1237, 1.0
    %v1239 = vrcp.pop %v1238
    %v1240 = vmul.f32 1.0, %v1239
    %v1241 = vmul.f32 %v1233, %v1132
    %v1242 = vmul.f32 %v1227, %v1234
    %v1243 = vadd.f32 %v1241, %v1242
    %v1244 = vtanh.pop %v1243
    %v1245 = vmul.f32 %v1240, %v1244
    %v1246 = vpack.c.bf16 %v1245, %v1245
    %1247 = vmatprep.subr.bf16.mxu0 %v962
    %1248 = vmatpush1.bf16.msra.mxu0 %v961
    %1249 = vmatprep.subr.bf16.mxu0 %v966
    %1250 = vmatpush1.bf16.msra.mxu0 %v965
    %1251 = vmatprep.subr.bf16.mxu0 %v970
    %1252 = vmatpush1.bf16.msra.mxu0 %v969
    %1253 = vmatprep.subr.bf16.mxu0 %v974
    %1254 = vmatpush1.bf16.msra.mxu0 %v973
    %1255 = vmatprep.subr.bf16.mxu0 %v978
    %1256 = vmatpush1.bf16.msra.mxu0 %v977
    %1257 = vmatprep.subr.bf16.mxu0 %v982
    %1258 = vmatpush1.bf16.msra.mxu0 %v981
    %1259 = vmatprep.subr.bf16.mxu0 %v986
    %1260 = vmatpush1.bf16.msra.mxu0 %v985
    %1261 = vmatprep.subr.bf16.mxu0 %v990
    %1262 = vmatpush1.bf16.msra.mxu0 %v989
    %1263 = vmatprep.subr.bf16.mxu0 0
    %1264 = vmatpush1.bf16.msra.mxu0 0
    %1265 = vmatprep.subr.bf16.mxu0 0
    %1266 = vmatpush1.bf16.msra.mxu0 0
    %1267 = vmatprep.subr.bf16.mxu0 0
    %1268 = vmatpush1.bf16.msra.mxu0 0
    %1269 = vmatprep.subr.bf16.mxu0 0
    %1270 = vmatpush1.bf16.msra.mxu0 0
    %1271 = vmatprep.subr.bf16.mxu0 0
    %1272 = vmatpush1.bf16.msra.mxu0 0
    %1273 = vmatprep.subr.bf16.mxu0 0
    %1274 = vmatpush1.bf16.msra.mxu0 0
    %1275 = vmatprep.subr.bf16.mxu0 0
    %1276 = vmatpush1.bf16.msra.mxu0 0
    %1277 = vmatprep.subr.bf16.mxu0 0
    %1278 = vmatpush1.bf16.msra.mxu0 0
    %1279 = vmatprep.mubr.bf16.mxu0 0
    %1280 = vmatmul.mubr.bf16.gmra.mrb[0].mxu0 %v1246
    %v1281 = vpop.f32.mrb[0].mxu0
    %v1282 = vadd.f32 0.0, %v1281
    %v1283 = vpop.f32.mrb[0].mxu0
    %v1284 = vadd.f32 0.0, %v1283
    %v1285 = vpop.f32.mrb[0].mxu0
    %v1286 = vpop.f32.mrb[0].mxu0
    %1287 = vdwg.mxu0
    %1288 = vmatprep.subr.bf16.mxu0 %v964
    %1289 = vmatpush1.bf16.msra.mxu0 %v963
    %1290 = vmatprep.subr.bf16.mxu0 %v968
    %1291 = vmatpush1.bf16.msra.mxu0 %v967
    %1292 = vmatprep.subr.bf16.mxu0 %v972
    %1293 = vmatpush1.bf16.msra.mxu0 %v971
    %1294 = vmatprep.subr.bf16.mxu0 %v976
    %1295 = vmatpush1.bf16.msra.mxu0 %v975
    %1296 = vmatprep.subr.bf16.mxu0 %v980
    %1297 = vmatpush1.bf16.msra.mxu0 %v979
    %1298 = vmatprep.subr.bf16.mxu0 %v984
    %1299 = vmatpush1.bf16.msra.mxu0 %v983
    %1300 = vmatprep.subr.bf16.mxu0 %v988
    %1301 = vmatpush1.bf16.msra.mxu0 %v987
    %1302 = vmatprep.subr.bf16.mxu0 %v992
    %1303 = vmatpush1.bf16.msra.mxu0 %v991
    %1304 = vmatprep.subr.bf16.mxu0 0
    %1305 = vmatpush1.bf16.msra.mxu0 0
    %1306 = vmatprep.subr.bf16.mxu0 0
    %1307 = vmatpush1.bf16.msra.mxu0 0
    %1308 = vmatprep.subr.bf16.mxu0 0
    %1309 = vmatpush1.bf16.msra.mxu0 0
    %1310 = vmatprep.subr.bf16.mxu0 0
    %1311 = vmatpush1.bf16.msra.mxu0 0
    %1312 = vmatprep.subr.bf16.mxu0 0
    %1313 = vmatpush1.bf16.msra.mxu0 0
    %1314 = vmatprep.subr.bf16.mxu0 0
    %1315 = vmatpush1.bf16.msra.mxu0 0
    %1316 = vmatprep.subr.bf16.mxu0 0
    %1317 = vmatpush1.bf16.msra.mxu0 0
    %1318 = vmatprep.subr.bf16.mxu0 0
    %1319 = vmatpush1.bf16.msra.mxu0 0
    %1320 = vmatprep.mubr.bf16.mxu0 0
    %1321 = vmatmul.mubr.bf16.gmra.mrb[0].mxu0 %v1246
    %v1322 = vpop.f32.mrb[0].mxu0
    %v1323 = vadd.f32 0.0, %v1322
    %v1324 = vpop.f32.mrb[0].mxu0
    %v1325 = vadd.f32 0.0, %v1324
    %v1326 = vpop.f32.mrb[0].mxu0
    %v1327 = vpop.f32.mrb[0].mxu0
    %1328 = vdwg.mxu0
    %v1329 = vadd.f32 %v311, %v1282
    %v1330 = vadd.f32 %v313, %v1284
    %v1331 = vadd.f32 %v384, %v1323
    %v1332 = vadd.f32 %v386, %v1325
    %v1333 = vxor.u32 %v1329, 2147483648
    %v1334 = vmul.f32 %v1333, 1.442695
    %v1335 = vpow.pop %v1334
    %v1336 = vadd.f32 %v1335, 1.0
    %v1337 = vrcp.pop %v1336
    %v1338 = vmul.f32 1.0, %v1337
    %v1339 = vxor.u32 %v1330, 2147483648
    %v1340 = vmul.f32 %v1339, 1.442695
    %v1341 = vpow.pop %v1340
    %v1342 = vadd.f32 %v1341, 1.0
    %v1343 = vrcp.pop %v1342
    %v1344 = vmul.f32 1.0, %v1343
    %v1345 = vtanh.pop %v1331
    %v1346 = vxor.u32 %v1332, 2147483648
    %v1347 = vmul.f32 %v1346, 1.442695
    %v1348 = vpow.pop %v1347
    %v1349 = vadd.f32 %v1348, 1.0
    %v1350 = vrcp.pop %v1349
    %v1351 = vmul.f32 1.0, %v1350
    %v1352 = vmul.f32 %v1344, %v1243
    %v1353 = vmul.f32 %v1338, %v1345
    %v1354 = vadd.f32 %v1352, %v1353
    %v1355 = vtanh.pop %v1354
    %v1356 = vmul.f32 %v1351, %v1355
    %v1357 = vpack.c.bf16 %v1356, %v1356
    %1358 = vmatprep.subr.bf16.mxu0 %v962
    %1359 = vmatpush1.bf16.msra.mxu0 %v961
    %1360 = vmatprep.subr.bf16.mxu0 %v966
    %1361 = vmatpush1.bf16.msra.mxu0 %v965
    %1362 = vmatprep.subr.bf16.mxu0 %v970
    %1363 = vmatpush1.bf16.msra.mxu0 %v969
    %1364 = vmatprep.subr.bf16.mxu0 %v974
    %1365 = vmatpush1.bf16.msra.mxu0 %v973
    %1366 = vmatprep.subr.bf16.mxu0 %v978
    %1367 = vmatpush1.bf16.msra.mxu0 %v977
    %1368 = vmatprep.subr.bf16.mxu0 %v982
    %1369 = vmatpush1.bf16.msra.mxu0 %v981
    %1370 = vmatprep.subr.bf16.mxu0 %v986
    %1371 = vmatpush1.bf16.msra.mxu0 %v985
    %1372 = vmatprep.subr.bf16.mxu0 %v990
    %1373 = vmatpush1.bf16.msra.mxu0 %v989
    %1374 = vmatprep.subr.bf16.mxu0 0
    %1375 = vmatpush1.bf16.msra.mxu0 0
    %1376 = vmatprep.subr.bf16.mxu0 0
    %1377 = vmatpush1.bf16.msra.mxu0 0
    %1378 = vmatprep.subr.bf16.mxu0 0
    %1379 = vmatpush1.bf16.msra.mxu0 0
    %1380 = vmatprep.subr.bf16.mxu0 0
    %1381 = vmatpush1.bf16.msra.mxu0 0
    %1382 = vmatprep.subr.bf16.mxu0 0
    %1383 = vmatpush1.bf16.msra.mxu0 0
    %1384 = vmatprep.subr.bf16.mxu0 0
    %1385 = vmatpush1.bf16.msra.mxu0 0
    %1386 = vmatprep.subr.bf16.mxu0 0
    %1387 = vmatpush1.bf16.msra.mxu0 0
    %1388 = vmatprep.subr.bf16.mxu0 0
    %1389 = vmatpush1.bf16.msra.mxu0 0
    %1390 = vmatprep.mubr.bf16.mxu0 0
    %1391 = vmatmul.mubr.bf16.gmra.mrb[0].mxu0 %v1357
    %v1392 = vpop.f32.mrb[0].mxu0
    %v1393 = vadd.f32 0.0, %v1392
    %v1394 = vpop.f32.mrb[0].mxu0
    %v1395 = vadd.f32 0.0, %v1394
    %v1396 = vpop.f32.mrb[0].mxu0
    %v1397 = vpop.f32.mrb[0].mxu0
    %1398 = vdwg.mxu0
    %1399 = vmatprep.subr.bf16.mxu0 %v964
    %1400 = vmatpush1.bf16.msra.mxu0 %v963
    %1401 = vmatprep.subr.bf16.mxu0 %v968
    %1402 = vmatpush1.bf16.msra.mxu0 %v967
    %1403 = vmatprep.subr.bf16.mxu0 %v972
    %1404 = vmatpush1.bf16.msra.mxu0 %v971
    %1405 = vmatprep.subr.bf16.mxu0 %v976
    %1406 = vmatpush1.bf16.msra.mxu0 %v975
    %1407 = vmatprep.subr.bf16.mxu0 %v980
    %1408 = vmatpush1.bf16.msra.mxu0 %v979
    %1409 = vmatprep.subr.bf16.mxu0 %v984
    %1410 = vmatpush1.bf16.msra.mxu0 %v983
    %1411 = vmatprep.subr.bf16.mxu0 %v988
    %1412 = vmatpush1.bf16.msra.mxu0 %v987
    %1413 = vmatprep.subr.bf16.mxu0 %v992
    %1414 = vmatpush1.bf16.msra.mxu0 %v991
    %1415 = vmatprep.subr.bf16.mxu0 0
    %1416 = vmatpush1.bf16.msra.mxu0 0
    %1417 = vmatprep.subr.bf16.mxu0 0
    %1418 = vmatpush1.bf16.msra.mxu0 0
    %1419 = vmatprep.subr.bf16.mxu0 0
    %1420 = vmatpush1.bf16.msra.mxu0 0
    %1421 = vmatprep.subr.bf16.mxu0 0
    %1422 = vmatpush1.bf16.msra.mxu0 0
    %1423 = vmatprep.subr.bf16.mxu0 0
    %1424 = vmatpush1.bf16.msra.mxu0 0
    %1425 = vmatprep.subr.bf16.mxu0 0
    %1426 = vmatpush1.bf16.msra.mxu0 0
    %1427 = vmatprep.subr.bf16.mxu0 0
    %1428 = vmatpush1.bf16.msra.mxu0 0
    %1429 = vmatprep.subr.bf16.mxu0 0
    %1430 = vmatpush1.bf16.msra.mxu0 0
    %1431 = vmatprep.mubr.bf16.mxu0 0
    %1432 = vmatmul.mubr.bf16.gmra.mrb[0].mxu0 %v1357
    %v1433 = vpop.f32.mrb[0].mxu0
    %v1434 = vadd.f32 0.0, %v1433
    %v1435 = vpop.f32.mrb[0].mxu0
    %v1436 = vadd.f32 0.0, %v1435
    %v1437 = vpop.f32.mrb[0].mxu0
    %v1438 = vpop.f32.mrb[0].mxu0
    %1439 = vdwg.mxu0
    %v1440 = vadd.f32 %v315, %v1393
    %v1441 = vadd.f32 %v317, %v1395
    %v1442 = vadd.f32 %v388, %v1434
    %v1443 = vadd.f32 %v390, %v1436
    %v1444 = vxor.u32 %v1440, 2147483648
    %v1445 = vmul.f32 %v1444, 1.442695
    %v1446 = vpow.pop %v1445
    %v1447 = vadd.f32 %v1446, 1.0
    %v1448 = vrcp.pop %v1447
    %v1449 = vmul.f32 1.0, %v1448
    %v1450 = vxor.u32 %v1441, 2147483648
    %v1451 = vmul.f32 %v1450, 1.442695
    %v1452 = vpow.pop %v1451
    %v1453 = vadd.f32 %v1452, 1.0
    %v1454 = vrcp.pop %v1453
    %v1455 = vmul.f32 1.0, %v1454
    %v1456 = vtanh.pop %v1442
    %v1457 = vxor.u32 %v1443, 2147483648
    %v1458 = vmul.f32 %v1457, 1.442695
    %v1459 = vpow.pop %v1458
    %v1460 = vadd.f32 %v1459, 1.0
    %v1461 = vrcp.pop %v1460
    %v1462 = vmul.f32 1.0, %v1461
    %v1463 = vmul.f32 %v1455, %v1354
    %v1464 = vmul.f32 %v1449, %v1456
    %v1465 = vadd.f32 %v1463, %v1464
    %v1466 = vtanh.pop %v1465
    %v1467 = vmul.f32 %v1462, %v1466
    %v1468 = vpack.c.bf16 %v1467, %v1467
    %1469 = vmatprep.subr.bf16.mxu0 %v962
    %1470 = vmatpush1.bf16.msra.mxu0 %v961
    %1471 = vmatprep.subr.bf16.mxu0 %v966
    %1472 = vmatpush1.bf16.msra.mxu0 %v965
    %1473 = vmatprep.subr.bf16.mxu0 %v970
    %1474 = vmatpush1.bf16.msra.mxu0 %v969
    %1475 = vmatprep.subr.bf16.mxu0 %v974
    %1476 = vmatpush1.bf16.msra.mxu0 %v973
    %1477 = vmatprep.subr.bf16.mxu0 %v978
    %1478 = vmatpush1.bf16.msra.mxu0 %v977
    %1479 = vmatprep.subr.bf16.mxu0 %v982
    %1480 = vmatpush1.bf16.msra.mxu0 %v981
    %1481 = vmatprep.subr.bf16.mxu0 %v986
    %1482 = vmatpush1.bf16.msra.mxu0 %v985
    %1483 = vmatprep.subr.bf16.mxu0 %v990
    %1484 = vmatpush1.bf16.msra.mxu0 %v989
    %1485 = vmatprep.subr.bf16.mxu0 0
    %1486 = vmatpush1.bf16.msra.mxu0 0
    %1487 = vmatprep.subr.bf16.mxu0 0
    %1488 = vmatpush1.bf16.msra.mxu0 0
    %1489 = vmatprep.subr.bf16.mxu0 0
    %1490 = vmatpush1.bf16.msra.mxu0 0
    %1491 = vmatprep.subr.bf16.mxu0 0
    %1492 = vmatpush1.bf16.msra.mxu0 0
    %1493 = vmatprep.subr.bf16.mxu0 0
    %1494 = vmatpush1.bf16.msra.mxu0 0
    %1495 = vmatprep.subr.bf16.mxu0 0
    %1496 = vmatpush1.bf16.msra.mxu0 0
    %1497 = vmatprep.subr.bf16.mxu0 0
    %1498 = vmatpush1.bf16.msra.mxu0 0
    %1499 = vmatprep.subr.bf16.mxu0 0
    %1500 = vmatpush1.bf16.msra.mxu0 0
    %1501 = vmatprep.mubr.bf16.mxu0 0
    %1502 = vmatmul.mubr.bf16.gmra.mrb[0].mxu0 %v1468
    %v1503 = vpop.f32.mrb[0].mxu0
    %v1504 = vadd.f32 0.0, %v1503
    %v1505 = vpop.f32.mrb[0].mxu0
    %v1506 = vadd.f32 0.0, %v1505
    %v1507 = vpop.f32.mrb[0].mxu0
    %v1508 = vpop.f32.mrb[0].mxu0
    %1509 = vdwg.mxu0
    %1510 = vmatprep.subr.bf16.mxu0 %v964
    %1511 = vmatpush1.bf16.msra.mxu0 %v963
    %1512 = vmatprep.subr.bf16.mxu0 %v968
    %1513 = vmatpush1.bf16.msra.mxu0 %v967
    %1514 = vmatprep.subr.bf16.mxu0 %v972
    %1515 = vmatpush1.bf16.msra.mxu0 %v971
    %1516 = vmatprep.subr.bf16.mxu0 %v976
    %1517 = vmatpush1.bf16.msra.mxu0 %v975
    %1518 = vmatprep.subr.bf16.mxu0 %v980
    %1519 = vmatpush1.bf16.msra.mxu0 %v979
    %1520 = vmatprep.subr.bf16.mxu0 %v984
    %1521 = vmatpush1.bf16.msra.mxu0 %v983
    %1522 = vmatprep.subr.bf16.mxu0 %v988
    %1523 = vmatpush1.bf16.msra.mxu0 %v987
    %1524 = vmatprep.subr.bf16.mxu0 %v992
    %1525 = vmatpush1.bf16.msra.mxu0 %v991
    %1526 = vmatprep.subr.bf16.mxu0 0
    %1527 = vmatpush1.bf16.msra.mxu0 0
    %1528 = vmatprep.subr.bf16.mxu0 0
    %1529 = vmatpush1.bf16.msra.mxu0 0
    %1530 = vmatprep.subr.bf16.mxu0 0
    %1531 = vmatpush1.bf16.msra.mxu0 0
    %1532 = vmatprep.subr.bf16.mxu0 0
    %1533 = vmatpush1.bf16.msra.mxu0 0
    %1534 = vmatprep.subr.bf16.mxu0 0
    %1535 = vmatpush1.bf16.msra.mxu0 0
    %1536 = vmatprep.subr.bf16.mxu0 0
    %1537 = vmatpush1.bf16.msra.mxu0 0
    %1538 = vmatprep.subr.bf16.mxu0 0
    %1539 = vmatpush1.bf16.msra.mxu0 0
    %1540 = vmatprep.subr.bf16.mxu0 0
    %1541 = vmatpush1.bf16.msra.mxu0 0
    %1542 = vmatprep.mubr.bf16.mxu0 0
    %1543 = vmatmul.mubr.bf16.gmra.mrb[0].mxu0 %v1468
    %v1544 = vpop.f32.mrb[0].mxu0
    %v1545 = vadd.f32 0.0, %v1544
    %v1546 = vpop.f32.mrb[0].mxu0
    %v1547 = vadd.f32 0.0, %v1546
    %v1548 = vpop.f32.mrb[0].mxu0
    %v1549 = vpop.f32.mrb[0].mxu0
    %1550 = vdwg.mxu0
    %v1551 = vadd.f32 %v321, %v1504
    %v1552 = vadd.f32 %v323, %v1506
    %v1553 = vadd.f32 %v394, %v1545
    %v1554 = vadd.f32 %v396, %v1547
    %v1555 = vxor.u32 %v1551, 2147483648
    %v1556 = vmul.f32 %v1555, 1.442695
    %v1557 = vpow.pop %v1556
    %v1558 = vadd.f32 %v1557, 1.0
    %v1559 = vrcp.pop %v1558
    %v1560 = vmul.f32 1.0, %v1559
    %v1561 = vxor.u32 %v1552, 2147483648
    %v1562 = vmul.f32 %v1561, 1.442695
    %v1563 = vpow.pop %v1562
    %v1564 = vadd.f32 %v1563, 1.0
    %v1565 = vrcp.pop %v1564
    %v1566 = vmul.f32 1.0, %v1565
    %v1567 = vtanh.pop %v1553
    %v1568 = vxor.u32 %v1554, 2147483648
    %v1569 = vmul.f32 %v1568, 1.442695
    %v1570 = vpow.pop %v1569
    %v1571 = vadd.f32 %v1570, 1.0
    %v1572 = vrcp.pop %v1571
    %v1573 = vmul.f32 1.0, %v1572
    %v1574 = vmul.f32 %v1566, %v1465
    %v1575 = vmul.f32 %v1560, %v1567
    %v1576 = vadd.f32 %v1574, %v1575
    %v1577 = vtanh.pop %v1576
    %v1578 = vmul.f32 %v1573, %v1577
    %v1579 = vpack.c.bf16 %v1578, %v1578
    %1580 = vmatprep.subr.bf16.mxu0 %v962
    %1581 = vmatpush1.bf16.msra.mxu0 %v961
    %1582 = vmatprep.subr.bf16.mxu0 %v966
    %1583 = vmatpush1.bf16.msra.mxu0 %v965
    %1584 = vmatprep.subr.bf16.mxu0 %v970
    %1585 = vmatpush1.bf16.msra.mxu0 %v969
    %1586 = vmatprep.subr.bf16.mxu0 %v974
    %1587 = vmatpush1.bf16.msra.mxu0 %v973
    %1588 = vmatprep.subr.bf16.mxu0 %v978
    %1589 = vmatpush1.bf16.msra.mxu0 %v977
    %1590 = vmatprep.subr.bf16.mxu0 %v982
    %1591 = vmatpush1.bf16.msra.mxu0 %v981
    %1592 = vmatprep.subr.bf16.mxu0 %v986
    %1593 = vmatpush1.bf16.msra.mxu0 %v985
    %1594 = vmatprep.subr.bf16.mxu0 %v990
    %1595 = vmatpush1.bf16.msra.mxu0 %v989
    %1596 = vmatprep.subr.bf16.mxu0 0
    %1597 = vmatpush1.bf16.msra.mxu0 0
    %1598 = vmatprep.subr.bf16.mxu0 0
    %1599 = vmatpush1.bf16.msra.mxu0 0
    %1600 = vmatprep.subr.bf16.mxu0 0
    %1601 = vmatpush1.bf16.msra.mxu0 0
    %1602 = vmatprep.subr.bf16.mxu0 0
    %1603 = vmatpush1.bf16.msra.mxu0 0
    %1604 = vmatprep.subr.bf16.mxu0 0
    %1605 = vmatpush1.bf16.msra.mxu0 0
    %1606 = vmatprep.subr.bf16.mxu0 0
    %1607 = vmatpush1.bf16.msra.mxu0 0
    %1608 = vmatprep.subr.bf16.mxu0 0
    %1609 = vmatpush1.bf16.msra.mxu0 0
    %1610 = vmatprep.subr.bf16.mxu0 0
    %1611 = vmatpush1.bf16.msra.mxu0 0
    %1612 = vmatprep.mubr.bf16.mxu0 0
    %1613 = vmatmul.mubr.bf16.gmra.mrb[0].mxu0 %v1579
    %v1614 = vpop.f32.mrb[0].mxu0
    %v1615 = vadd.f32 0.0, %v1614
    %v1616 = vpop.f32.mrb[0].mxu0
    %v1617 = vadd.f32 0.0, %v1616
    %v1618 = vpop.f32.mrb[0].mxu0
    %v1619 = vpop.f32.mrb[0].mxu0
    %1620 = vdwg.mxu0
    %1621 = vmatprep.subr.bf16.mxu0 %v964
    %1622 = vmatpush1.bf16.msra.mxu0 %v963
    %1623 = vmatprep.subr.bf16.mxu0 %v968
    %1624 = vmatpush1.bf16.msra.mxu0 %v967
    %1625 = vmatprep.subr.bf16.mxu0 %v972
    %1626 = vmatpush1.bf16.msra.mxu0 %v971
    %1627 = vmatprep.subr.bf16.mxu0 %v976
    %1628 = vmatpush1.bf16.msra.mxu0 %v975
    %1629 = vmatprep.subr.bf16.mxu0 %v980
    %1630 = vmatpush1.bf16.msra.mxu0 %v979
    %1631 = vmatprep.subr.bf16.mxu0 %v984
    %1632 = vmatpush1.bf16.msra.mxu0 %v983
    %1633 = vmatprep.subr.bf16.mxu0 %v988
    %1634 = vmatpush1.bf16.msra.mxu0 %v987
    %1635 = vmatprep.subr.bf16.mxu0 %v992
    %1636 = vmatpush1.bf16.msra.mxu0 %v991
    %1637 = vmatprep.subr.bf16.mxu0 0
    %1638 = vmatpush1.bf16.msra.mxu0 0
    %1639 = vmatprep.subr.bf16.mxu0 0
    %1640 = vmatpush1.bf16.msra.mxu0 0
    %1641 = vmatprep.subr.bf16.mxu0 0
    %1642 = vmatpush1.bf16.msra.mxu0 0
    %1643 = vmatprep.subr.bf16.mxu0 0
    %1644 = vmatpush1.bf16.msra.mxu0 0
    %1645 = vmatprep.subr.bf16.mxu0 0
    %1646 = vmatpush1.bf16.msra.mxu0 0
    %1647 = vmatprep.subr.bf16.mxu0 0
    %1648 = vmatpush1.bf16.msra.mxu0 0
    %1649 = vmatprep.subr.bf16.mxu0 0
    %1650 = vmatpush1.bf16.msra.mxu0 0
    %1651 = vmatprep.subr.bf16.mxu0 0
    %1652 = vmatpush1.bf16.msra.mxu0 0
    %1653 = vmatprep.mubr.bf16.mxu0 0
    %1654 = vmatmul.mubr.bf16.gmra.mrb[0].mxu0 %v1579
    %v1655 = vpop.f32.mrb[0].mxu0
    %v1656 = vadd.f32 0.0, %v1655
    %v1657 = vpop.f32.mrb[0].mxu0
    %v1658 = vadd.f32 0.0, %v1657
    %v1659 = vpop.f32.mrb[0].mxu0
    %v1660 = vpop.f32.mrb[0].mxu0
    %1661 = vdwg.mxu0
    %v1662 = vadd.f32 %v325, %v1615
    %v1663 = vadd.f32 %v327, %v1617
    %v1664 = vadd.f32 %v398, %v1656
    %v1665 = vadd.f32 %v400, %v1658
    %v1666 = vxor.u32 %v1662, 2147483648
    %v1667 = vmul.f32 %v1666, 1.442695
    %v1668 = vpow.pop %v1667
    %v1669 = vadd.f32 %v1668, 1.0
    %v1670 = vrcp.pop %v1669
    %v1671 = vmul.f32 1.0, %v1670
    %v1672 = vxor.u32 %v1663, 2147483648
    %v1673 = vmul.f32 %v1672, 1.442695
    %v1674 = vpow.pop %v1673
    %v1675 = vadd.f32 %v1674, 1.0
    %v1676 = vrcp.pop %v1675
    %v1677 = vmul.f32 1.0, %v1676
    %v1678 = vtanh.pop %v1664
    %v1679 = vxor.u32 %v1665, 2147483648
    %v1680 = vmul.f32 %v1679, 1.442695
    %v1681 = vpow.pop %v1680
    %v1682 = vadd.f32 %v1681, 1.0
    %v1683 = vrcp.pop %v1682
    %v1684 = vmul.f32 1.0, %v1683
    %v1685 = vmul.f32 %v1677, %v1576
    %v1686 = vmul.f32 %v1671, %v1678
    %v1687 = vadd.f32 %v1685, %v1686
    %v1688 = vtanh.pop %v1687
    %v1689 = vmul.f32 %v1684, %v1688
    %v1690 = vpack.c.bf16 %v1689, %v1689
    %1691 = vmatprep.subr.bf16.mxu0 %v962
    %1692 = vmatpush1.bf16.msra.mxu0 %v961
    %1693 = vmatprep.subr.bf16.mxu0 %v966
    %1694 = vmatpush1.bf16.msra.mxu0 %v965
    %1695 = vmatprep.subr.bf16.mxu0 %v970
    %1696 = vmatpush1.bf16.msra.mxu0 %v969
    %1697 = vmatprep.subr.bf16.mxu0 %v974
    %1698 = vmatpush1.bf16.msra.mxu0 %v973
    %1699 = vmatprep.subr.bf16.mxu0 %v978
    %1700 = vmatpush1.bf16.msra.mxu0 %v977
    %1701 = vmatprep.subr.bf16.mxu0 %v982
    %1702 = vmatpush1.bf16.msra.mxu0 %v981
    %1703 = vmatprep.subr.bf16.mxu0 %v986
    %1704 = vmatpush1.bf16.msra.mxu0 %v985
    %1705 = vmatprep.subr.bf16.mxu0 %v990
    %1706 = vmatpush1.bf16.msra.mxu0 %v989
    %1707 = vmatprep.subr.bf16.mxu0 0
    %1708 = vmatpush1.bf16.msra.mxu0 0
    %1709 = vmatprep.subr.bf16.mxu0 0
    %1710 = vmatpush1.bf16.msra.mxu0 0
    %1711 = vmatprep.subr.bf16.mxu0 0
    %1712 = vmatpush1.bf16.msra.mxu0 0
    %1713 = vmatprep.subr.bf16.mxu0 0
    %1714 = vmatpush1.bf16.msra.mxu0 0
    %1715 = vmatprep.subr.bf16.mxu0 0
    %1716 = vmatpush1.bf16.msra.mxu0 0
    %1717 = vmatprep.subr.bf16.mxu0 0
    %1718 = vmatpush1.bf16.msra.mxu0 0
    %1719 = vmatprep.subr.bf16.mxu0 0
    %1720 = vmatpush1.bf16.msra.mxu0 0
    %1721 = vmatprep.subr.bf16.mxu0 0
    %1722 = vmatpush1.bf16.msra.mxu0 0
    %1723 = vmatprep.mubr.bf16.mxu0 0
    %1724 = vmatmul.mubr.bf16.gmra.mrb[0].mxu0 %v1690
    %v1725 = vpop.f32.mrb[0].mxu0
    %v1726 = vadd.f32 0.0, %v1725
    %v1727 = vpop.f32.mrb[0].mxu0
    %v1728 = vadd.f32 0.0, %v1727
    %v1729 = vpop.f32.mrb[0].mxu0
    %v1730 = vpop.f32.mrb[0].mxu0
    %1731 = vdwg.mxu0
    %1732 = vmatprep.subr.bf16.mxu0 %v964
    %1733 = vmatpush1.bf16.msra.mxu0 %v963
    %1734 = vmatprep.subr.bf16.mxu0 %v968
    %1735 = vmatpush1.bf16.msra.mxu0 %v967
    %1736 = vmatprep.subr.bf16.mxu0 %v972
    %1737 = vmatpush1.bf16.msra.mxu0 %v971
    %1738 = vmatprep.subr.bf16.mxu0 %v976
    %1739 = vmatpush1.bf16.msra.mxu0 %v975
    %1740 = vmatprep.subr.bf16.mxu0 %v980
    %1741 = vmatpush1.bf16.msra.mxu0 %v979
    %1742 = vmatprep.subr.bf16.mxu0 %v984
    %1743 = vmatpush1.bf16.msra.mxu0 %v983
    %1744 = vmatprep.subr.bf16.mxu0 %v988
    %1745 = vmatpush1.bf16.msra.mxu0 %v987
    %1746 = vmatprep.subr.bf16.mxu0 %v992
    %1747 = vmatpush1.bf16.msra.mxu0 %v991
    %1748 = vmatprep.subr.bf16.mxu0 0
    %1749 = vmatpush1.bf16.msra.mxu0 0
    %1750 = vmatprep.subr.bf16.mxu0 0
    %1751 = vmatpush1.bf16.msra.mxu0 0
    %1752 = vmatprep.subr.bf16.mxu0 0
    %1753 = vmatpush1.bf16.msra.mxu0 0
    %1754 = vmatprep.subr.bf16.mxu0 0
    %1755 = vmatpush1.bf16.msra.mxu0 0
    %1756 = vmatprep.subr.bf16.mxu0 0
    %1757 = vmatpush1.bf16.msra.mxu0 0
    %1758 = vmatprep.subr.bf16.mxu0 0
    %1759 = vmatpush1.bf16.msra.mxu0 0
    %1760 = vmatprep.subr.bf16.mxu0 0
    %1761 = vmatpush1.bf16.msra.mxu0 0
    %1762 = vmatprep.subr.bf16.mxu0 0
    %1763 = vmatpush1.bf16.msra.mxu0 0
    %1764 = vmatprep.mubr.bf16.mxu0 0
    %1765 = vmatmul.mubr.bf16.gmra.mrb[0].mxu0 %v1690
    %v1766 = vpop.f32.mrb[0].mxu0
    %v1767 = vadd.f32 0.0, %v1766
    %v1768 = vpop.f32.mrb[0].mxu0
    %v1769 = vadd.f32 0.0, %v1768
    %v1770 = vpop.f32.mrb[0].mxu0
    %v1771 = vpop.f32.mrb[0].mxu0
    %1772 = vdwg.mxu0
    %v1773 = vadd.f32 %v331, %v1726
    %v1774 = vadd.f32 %v333, %v1728
    %v1775 = vadd.f32 %v404, %v1767
    %v1776 = vadd.f32 %v406, %v1769
    %v1777 = vxor.u32 %v1773, 2147483648
    %v1778 = vmul.f32 %v1777, 1.442695
    %v1779 = vpow.pop %v1778
    %v1780 = vadd.f32 %v1779, 1.0
    %v1781 = vrcp.pop %v1780
    %v1782 = vmul.f32 1.0, %v1781
    %v1783 = vxor.u32 %v1774, 2147483648
    %v1784 = vmul.f32 %v1783, 1.442695
    %v1785 = vpow.pop %v1784
    %v1786 = vadd.f32 %v1785, 1.0
    %v1787 = vrcp.pop %v1786
    %v1788 = vmul.f32 1.0, %v1787
    %v1789 = vtanh.pop %v1775
    %v1790 = vxor.u32 %v1776, 2147483648
    %v1791 = vmul.f32 %v1790, 1.442695
    %v1792 = vpow.pop %v1791
    %v1793 = vadd.f32 %v1792, 1.0
    %v1794 = vrcp.pop %v1793
    %v1795 = vmul.f32 1.0, %v1794
    %v1796 = vmul.f32 %v1788, %v1687
    %v1797 = vmul.f32 %v1782, %v1789
    %v1798 = vadd.f32 %v1796, %v1797
    %v1799 = vtanh.pop %v1798
    %v1800 = vmul.f32 %v1795, %v1799
    %v1801 = vpack.c.bf16 %v1800, %v1800
    %1802 = vmatprep.subr.bf16.mxu0 %v962
    %1803 = vmatpush1.bf16.msra.mxu0 %v961
    %1804 = vmatprep.subr.bf16.mxu0 %v966
    %1805 = vmatpush1.bf16.msra.mxu0 %v965
    %1806 = vmatprep.subr.bf16.mxu0 %v970
    %1807 = vmatpush1.bf16.msra.mxu0 %v969
    %1808 = vmatprep.subr.bf16.mxu0 %v974
    %1809 = vmatpush1.bf16.msra.mxu0 %v973
    %1810 = vmatprep.subr.bf16.mxu0 %v978
    %1811 = vmatpush1.bf16.msra.mxu0 %v977
    %1812 = vmatprep.subr.bf16.mxu0 %v982
    %1813 = vmatpush1.bf16.msra.mxu0 %v981
    %1814 = vmatprep.subr.bf16.mxu0 %v986
    %1815 = vmatpush1.bf16.msra.mxu0 %v985
    %1816 = vmatprep.subr.bf16.mxu0 %v990
    %1817 = vmatpush1.bf16.msra.mxu0 %v989
    %1818 = vmatprep.subr.bf16.mxu0 0
    %1819 = vmatpush1.bf16.msra.mxu0 0
    %1820 = vmatprep.subr.bf16.mxu0 0
    %1821 = vmatpush1.bf16.msra.mxu0 0
    %1822 = vmatprep.subr.bf16.mxu0 0
    %1823 = vmatpush1.bf16.msra.mxu0 0
    %1824 = vmatprep.subr.bf16.mxu0 0
    %1825 = vmatpush1.bf16.msra.mxu0 0
    %1826 = vmatprep.subr.bf16.mxu0 0
    %1827 = vmatpush1.bf16.msra.mxu0 0
    %1828 = vmatprep.subr.bf16.mxu0 0
    %1829 = vmatpush1.bf16.msra.mxu0 0
    %1830 = vmatprep.subr.bf16.mxu0 0
    %1831 = vmatpush1.bf16.msra.mxu0 0
    %1832 = vmatprep.subr.bf16.mxu0 0
    %1833 = vmatpush1.bf16.msra.mxu0 0
    %1834 = vmatprep.mubr.bf16.mxu0 0
    %1835 = vmatmul.mubr.bf16.gmra.mrb[0].mxu0 %v1801
    %v1836 = vpop.f32.mrb[0].mxu0
    %v1837 = vadd.f32 0.0, %v1836
    %v1838 = vpop.f32.mrb[0].mxu0
    %v1839 = vadd.f32 0.0, %v1838
    %v1840 = vpop.f32.mrb[0].mxu0
    %v1841 = vpop.f32.mrb[0].mxu0
    %1842 = vdwg.mxu0
    %1843 = vmatprep.subr.bf16.mxu0 %v964
    %1844 = vmatpush1.bf16.msra.mxu0 %v963
    %1845 = vmatprep.subr.bf16.mxu0 %v968
    %1846 = vmatpush1.bf16.msra.mxu0 %v967
    %1847 = vmatprep.subr.bf16.mxu0 %v972
    %1848 = vmatpush1.bf16.msra.mxu0 %v971
    %1849 = vmatprep.subr.bf16.mxu0 %v976
    %1850 = vmatpush1.bf16.msra.mxu0 %v975
    %1851 = vmatprep.subr.bf16.mxu0 %v980
    %1852 = vmatpush1.bf16.msra.mxu0 %v979
    %1853 = vmatprep.subr.bf16.mxu0 %v984
    %1854 = vmatpush1.bf16.msra.mxu0 %v983
    %1855 = vmatprep.subr.bf16.mxu0 %v988
    %1856 = vmatpush1.bf16.msra.mxu0 %v987
    %1857 = vmatprep.subr.bf16.mxu0 %v992
    %1858 = vmatpush1.bf16.msra.mxu0 %v991
    %1859 = vmatprep.subr.bf16.mxu0 0
    %1860 = vmatpush1.bf16.msra.mxu0 0
    %1861 = vmatprep.subr.bf16.mxu0 0
    %1862 = vmatpush1.bf16.msra.mxu0 0
    %1863 = vmatprep.subr.bf16.mxu0 0
    %1864 = vmatpush1.bf16.msra.mxu0 0
    %1865 = vmatprep.subr.bf16.mxu0 0
    %1866 = vmatpush1.bf16.msra.mxu0 0
    %1867 = vmatprep.subr.bf16.mxu0 0
    %1868 = vmatpush1.bf16.msra.mxu0 0
    %1869 = vmatprep.subr.bf16.mxu0 0
    %1870 = vmatpush1.bf16.msra.mxu0 0
    %1871 = vmatprep.subr.bf16.mxu0 0
    %1872 = vmatpush1.bf16.msra.mxu0 0
    %1873 = vmatprep.subr.bf16.mxu0 0
    %1874 = vmatpush1.bf16.msra.mxu0 0
    %1875 = vmatprep.mubr.bf16.mxu0 0
    %1876 = vmatmul.mubr.bf16.gmra.mrb[0].mxu0 %v1801
    %v1877 = vpop.f32.mrb[0].mxu0
    %v1878 = vadd.f32 0.0, %v1877
    %v1879 = vpop.f32.mrb[0].mxu0
    %v1880 = vadd.f32 0.0, %v1879
    %v1881 = vpop.f32.mrb[0].mxu0
    %v1882 = vpop.f32.mrb[0].mxu0
    %1883 = vdwg.mxu0
    %v1884 = vadd.f32 %v335, %v1837
    %v1885 = vadd.f32 %v337, %v1839
    %v1886 = vadd.f32 %v408, %v1878
    %v1887 = vadd.f32 %v410, %v1880
    %v1888 = vxor.u32 %v1884, 2147483648
    %v1889 = vmul.f32 %v1888, 1.442695
    %v1890 = vpow.pop %v1889
    %v1891 = vadd.f32 %v1890, 1.0
    %v1892 = vrcp.pop %v1891
    %v1893 = vmul.f32 1.0, %v1892
    %v1894 = vxor.u32 %v1885, 2147483648
    %v1895 = vmul.f32 %v1894, 1.442695
    %v1896 = vpow.pop %v1895
    %v1897 = vadd.f32 %v1896, 1.0
    %v1898 = vrcp.pop %v1897
    %v1899 = vmul.f32 1.0, %v1898
    %v1900 = vtanh.pop %v1886
    %v1901 = vxor.u32 %v1887, 2147483648
    %v1902 = vmul.f32 %v1901, 1.442695
    %v1903 = vpow.pop %v1902
    %v1904 = vadd.f32 %v1903, 1.0
    %v1905 = vrcp.pop %v1904
    %v1906 = vmul.f32 1.0, %v1905
    %v1907 = vmul.f32 %v1899, %v1798
    %v1908 = vmul.f32 %v1893, %v1900
    %v1909 = vadd.f32 %v1907, %v1908
    %v1910 = vtanh.pop %v1909
    %v1911 = vmul.f32 %v1906, %v1910
    %v1912 = vpack.c.bf16 %v1911, %v1911
    %v1913 = vpack.c.bf16 %v864, %v864
    %v1914 = vld [vmem:[%s8] sm:$0xf]
    %v1915 = vld [vmem:[%s8 + $0x4] sm:$0xf]
    %v1916 = vld [vmem:[%s8 + $0x8] sm:$0xf]
    %v1917 = vld [vmem:[%s8 + $0xc] sm:$0xf]
    %v1918 = vld [vmem:[%s8 + $0x10] sm:$0xf]
    %v1919 = vld [vmem:[%s8 + $0x14] sm:$0xf]
    %v1920 = vld [vmem:[%s8 + $0x18] sm:$0xf]
    %v1921 = vld [vmem:[%s8 + $0x1c] sm:$0xf]
    %v1922 = vld [vmem:[%s8 + $0x20] sm:$0xf]
    %v1923 = vld [vmem:[%s8 + $0x24] sm:$0xf]
    %v1924 = vld [vmem:[%s8 + $0x28] sm:$0xf]
    %v1925 = vld [vmem:[%s8 + $0x2c] sm:$0xf]
    %v1926 = vld [vmem:[%s8 + $0x30] sm:$0xf]
    %v1927 = vld [vmem:[%s8 + $0x34] sm:$0xf]
    %v1928 = vld [vmem:[%s8 + $0x38] sm:$0xf]
    %v1929 = vld [vmem:[%s8 + $0x3c] sm:$0xf]
    %v1930 = vld [vmem:[%s8 + $0x40] sm:$0xf]
    %v1931 = vld [vmem:[%s8 + $0x44] sm:$0xf]
    %v1932 = vld [vmem:[%s8 + $0x48] sm:$0xf]
    %v1933 = vld [vmem:[%s8 + $0x4c] sm:$0xf]
    %v1934 = vld [vmem:[%s8 + $0x50] sm:$0xf]
    %v1935 = vld [vmem:[%s8 + $0x54] sm:$0xf]
    %v1936 = vld [vmem:[%s8 + $0x58] sm:$0xf]
    %v1937 = vld [vmem:[%s8 + $0x5c] sm:$0xf]
    %v1938 = vld [vmem:[%s8 + $0x60] sm:$0xf]
    %v1939 = vld [vmem:[%s8 + $0x64] sm:$0xf]
    %v1940 = vld [vmem:[%s8 + $0x68] sm:$0xf]
    %v1941 = vld [vmem:[%s8 + $0x6c] sm:$0xf]
    %v1942 = vld [vmem:[%s8 + $0x70] sm:$0xf]
    %v1943 = vld [vmem:[%s8 + $0x74] sm:$0xf]
    %v1944 = vld [vmem:[%s8 + $0x78] sm:$0xf]
    %v1945 = vld [vmem:[%s8 + $0x7c] sm:$0xf]
    %v1946 = vld [vmem:[%s9] sm:$0x1]
    %v1948 = vlaneseq
    %v1949 = vshrl.u32 %v1948, 7
    %v1950 = vsub.s32 0, %v1949
    %v1951 = vrot.slane %v1946, %v1950
    %v1985 = vunpack.c.l.b16 %v1914
    %v1986 = vunpack.c.l.b16 %v1915
    %v1987 = vunpack.c.l.b16 %v1916
    %v1988 = vunpack.c.l.b16 %v1917
    %v1989 = vunpack.c.l.b16 %v1918
    %v1990 = vunpack.c.l.b16 %v1919
    %v1991 = vunpack.c.l.b16 %v1920
    %v1992 = vunpack.c.l.b16 %v1921
    %v1993 = vunpack.c.l.b16 %v1922
    %v1994 = vunpack.c.l.b16 %v1923
    %v1995 = vunpack.c.l.b16 %v1924
    %v1996 = vunpack.c.l.b16 %v1925
    %v1997 = vunpack.c.l.b16 %v1926
    %v1998 = vunpack.c.l.b16 %v1927
    %v1999 = vunpack.c.l.b16 %v1928
    %v2000 = vunpack.c.l.b16 %v1929
    %v2001 = vunpack.c.l.b16 %v1930
    %v2002 = vunpack.c.l.b16 %v1931
    %v2003 = vunpack.c.l.b16 %v1932
    %v2004 = vunpack.c.l.b16 %v1933
    %v2005 = vunpack.c.l.b16 %v1934
    %v2006 = vunpack.c.l.b16 %v1935
    %v2007 = vunpack.c.l.b16 %v1936
    %v2008 = vunpack.c.l.b16 %v1937
    %v2009 = vunpack.c.l.b16 %v1938
    %v2010 = vunpack.c.l.b16 %v1939
    %v2011 = vunpack.c.l.b16 %v1940
    %v2012 = vunpack.c.l.b16 %v1941
    %v2013 = vunpack.c.l.b16 %v1942
    %v2014 = vunpack.c.l.b16 %v1943
    %v2015 = vunpack.c.l.b16 %v1944
    %v2016 = vunpack.c.l.b16 %v1945
    %v2017 = vpack.c.b16 %v1986, %v1985
    %v2018 = vpack.c.b16 %v1988, %v1987
    %v2019 = vpack.c.b16 %v1990, %v1989
    %v2020 = vpack.c.b16 %v1992, %v1991
    %v2021 = vpack.c.b16 %v1994, %v1993
    %v2022 = vpack.c.b16 %v1996, %v1995
    %v2023 = vpack.c.b16 %v1998, %v1997
    %v2024 = vpack.c.b16 %v2000, %v1999
    %v2025 = vpack.c.b16 %v2002, %v2001
    %v2026 = vpack.c.b16 %v2004, %v2003
    %v2027 = vpack.c.b16 %v2006, %v2005
    %v2028 = vpack.c.b16 %v2008, %v2007
    %v2029 = vpack.c.b16 %v2010, %v2009
    %v2030 = vpack.c.b16 %v2012, %v2011
    %v2031 = vpack.c.b16 %v2014, %v2013
    %v2032 = vpack.c.b16 %v2016, %v2015
    %2049 = vmatprep.subr.bf16.mxu0 0
    %2050 = vmatpush1.bf16.msra.mxu0 %v2017
    %2051 = vmatprep.subr.bf16.mxu0 0
    %2052 = vmatpush1.bf16.msra.mxu0 %v2018
    %2053 = vmatprep.subr.bf16.mxu0 0
    %2054 = vmatpush1.bf16.msra.mxu0 %v2019
    %2055 = vmatprep.subr.bf16.mxu0 0
    %2056 = vmatpush1.bf16.msra.mxu0 %v2020
    %2057 = vmatprep.subr.bf16.mxu0 0
    %2058 = vmatpush1.bf16.msra.mxu0 %v2021
    %2059 = vmatprep.subr.bf16.mxu0 0
    %2060 = vmatpush1.bf16.msra.mxu0 %v2022
    %2061 = vmatprep.subr.bf16.mxu0 0
    %2062 = vmatpush1.bf16.msra.mxu0 %v2023
    %2063 = vmatprep.subr.bf16.mxu0 0
    %2064 = vmatpush1.bf16.msra.mxu0 %v2024
    %2065 = vmatprep.subr.bf16.mxu0 0
    %2066 = vmatpush1.bf16.msra.mxu0 %v2025
    %2067 = vmatprep.subr.bf16.mxu0 0
    %2068 = vmatpush1.bf16.msra.mxu0 %v2026
    %2069 = vmatprep.subr.bf16.mxu0 0
    %2070 = vmatpush1.bf16.msra.mxu0 %v2027
    %2071 = vmatprep.subr.bf16.mxu0 0
    %2072 = vmatpush1.bf16.msra.mxu0 %v2028
    %2073 = vmatprep.subr.bf16.mxu0 0
    %2074 = vmatpush1.bf16.msra.mxu0 %v2029
    %2075 = vmatprep.subr.bf16.mxu0 0
    %2076 = vmatpush1.bf16.msra.mxu0 %v2030
    %2077 = vmatprep.subr.bf16.mxu0 0
    %2078 = vmatpush1.bf16.msra.mxu0 %v2031
    %2079 = vmatprep.subr.bf16.mxu0 0
    %2080 = vmatpush1.bf16.msra.mxu0 %v2032
    %2081 = vmatprep.mubr.bf16.mxu0 %v1913
    %2082 = vmatmul.mubr.bf16.gmra.mrb[0].mxu0 %v1912
    %v2083 = vpop.f32.mrb[0].mxu0
    %v2084 = vadd.f32 %v1951, %v2083
    %v2085 = vpop.f32.mrb[0].mxu0
    %v2086 = vpop.f32.mrb[0].mxu0
    %v2087 = vpop.f32.mrb[0].mxu0
    %2088 = vdwg.mxu0
    %vm2089 = vcmask 523264
    %2090 = vst.msk [vmem:[#allocation7] sm:$0xff] %vm2089, %v2084
    // Predicated region
    $region50: #{tpu_custom_call.1} parent=1 // pred_check
      _
    $region51: #{tpu_custom_call.1} parent=1 // pred_check_branch
      %2092 = sbr.rel (0) target = $region53
    $region52: #{tpu_custom_call.1} parent=1 // pred_region
      %s2094 = ssub.s32 128, 128
      %2095 = vsyncadd [#allocation4], %s2094
      %s2097 = sshll.u32 [#allocation7], 4
      %s2098 = int_to_ptr.vmem [resolvable:$true] %s2097
      %2100 = dma.vmem_to_hbm [thread:$0]  %s2098, 128, %s10, [#allocation4]
    $region53: #{tpu_custom_call.1} parent=1 // pred_fallthru
      _
    // Predicated region
    $region54: #{tpu_custom_call.1} parent=1 // pred_check
      _
    $region55: #{tpu_custom_call.1} parent=1 // pred_check_branch
      %2102 = sbr.rel (0) target = $region57
    $region56: #{tpu_custom_call.1} parent=1 // pred_region
      %2103 = dma.done [#allocation4], 128
    $region57: #{tpu_custom_call.1} parent=1 // pred_fallthru
      _
    %2104 = vsyncpa [#allocation3], 1
    %2105 = vsyncpa [#allocation6], 1
    %2106 = vsyncpa [#allocation4], 1

</llo_original>
